<compile_context>
chip_gen: v5e
topology: v5e:2x2
jax: 0.10.0
libtpu: 0.0.40
codegen_flags: <defaults>
</compile_context>

<pallas_src>
import functools

import jax
import jax.numpy as jnp
import numpy as np
from jax import lax
from jax.experimental import pallas as pl
from jax.experimental.pallas import tpu as pltpu


def _round_up8(n):
    return -(-n // 8) * 8


def _softmax_attention1_kernel(x_ref, w_in_ref, b_in_ref, wcc_ref, bcc_ref,
                               gamma_ref, beta_ref, out_ref, *, W,
                               gn_eps, norm_eps):
    Bblk, C, HW = x_ref.shape
    H = HW // W
    R = _round_up8(C)                       # row stride of fused conv weight blocks

    w_in = w_in_ref[...]                    # (3R+8, C)
    b_in = b_in_ref[...]                    # (3R+8, 1)
    gamma = gamma_ref[...]                  # (C, 1)
    beta = beta_ref[...]                    # (C, 1)

    # Indicator mask for the per-W-row softmax (softmax over dim=-1 of NCHW),
    # built once per grid step: mask[h, q] = (q belongs to spatial row h).
    h_iota = lax.broadcasted_iota(jnp.int32, (H, HW), 0)
    q_iota = lax.broadcasted_iota(jnp.int32, (H, HW), 1)
    lo = h_iota * W
    mask = (q_iota >= lo) & (q_iota < lo + W)          # (H, HW) bool

    def conv(idx, v):                                   # W(C,C) @ v + b(C,1)
        return (jnp.dot(wcc_ref[idx], v, preferred_element_type=jnp.float32)
                + bcc_ref[idx])

    for b in range(Bblk):                               # fully independent batches
        xf = x_ref[b]                                   # (C, HW) f32

        # Fused cv1 | cv2 | cv3 | cv6 : one MXU push, biases folded in.
        yin = (jnp.dot(w_in, xf, preferred_element_type=jnp.float32)
               + b_in)                                  # (3R+8, HW)
        y1 = yin[0:C]                                   # (C, HW)
        y2 = yin[R:R + C]                               # (C, HW)
        y3 = yin[2 * R:2 * R + C]                       # (C, HW)
        ye = yin[3 * R:3 * R + 1]                       # (1, HW)

        # --- softmax of ye over the W axis (per spatial row), per-row max ---
        m_h = jnp.max(jnp.where(mask, ye, -jnp.inf), axis=-1, keepdims=True)   # (H,1)
        m_q = jnp.sum(jnp.where(mask, m_h, 0.0), axis=0, keepdims=True)        # (1,HW)
        expv = jnp.exp(ye - m_q)                                               # (1,HW)
        s_h = jnp.sum(jnp.where(mask, expv, 0.0), axis=-1, keepdims=True)      # (H,1)
        inv_h = pl.reciprocal(s_h, approx=True)                                # (H,1)
        inv_q = jnp.sum(jnp.where(mask, inv_h, 0.0), axis=0, keepdims=True)    # (1,HW)
        ye_soft = expv * inv_q                                                 # (1,HW)

        # --- yee = cv8( GroupNorm_1group( cv7( ye_soft * y3 ) ) ) ---
        z = conv(0, ye_soft * y3)                       # cv7 -> (C, HW)
        n_elem = float(C * HW)
        s1 = jnp.sum(z)
        s2 = jnp.sum(z * z)
        mu = s1 / n_elem
        var = s2 / n_elem - mu * mu                     # single-pass stats
        zn = (z - mu) * lax.rsqrt(var + gn_eps)
        zn = zn * gamma + beta
        yee = conv(1, zn)                               # cv8 -> (C, HW)

        # --- spatial attention: c[p,q] = sum_ch y2[ch,p]*y1[ch,q]; softmax over q ---
        y1b = y1.astype(jnp.bfloat16)
        y2b = y2.astype(jnp.bfloat16)
        c = jnp.einsum('cp,cq->pq', y2b, y1b,
                       preferred_element_type=jnp.float32)        # (HW, HW) f32
        c = c - jnp.max(c, axis=-1, keepdims=True)
        ec = jnp.exp(c)                                           # (HW, HW)
        inv = pl.reciprocal(jnp.sum(ec, axis=-1, keepdims=True),
                            approx=True)                          # (HW, 1)
        cw = (ec * inv).astype(jnp.bfloat16)                      # probabilities

        # y_last[ch, q] = sum_p y3[ch, p] * cw[p, q]
        y_last = jnp.dot(y3.astype(jnp.bfloat16), cw,
                         preferred_element_type=jnp.float32)      # (C, HW)

        yla = y_last + yee                                        # (C, HW)

        # adaptive_avg_pool2d(., 1) -> cv4 -> normalize -> cv5
        avg = jnp.mean(yla, axis=-1, keepdims=True)               # (C, 1)
        y4 = conv(2, avg)                                         # cv4 -> (C, 1)
        nrm = jnp.sqrt(jnp.sum(y4 * y4))
        y4n = y4 / jnp.maximum(nrm, norm_eps)                     # F.normalize (dim=channels)
        y5 = conv(3, y4n)                                         # cv5 -> (C, 1)

        out_ref[b] = y5                                           # (C, 1)


def _pick_bblk(B):
    # Keep >= 2 grid steps whenever possible (v7x megacore sharding) while
    # amortizing the per-grid-step overhead for large B.
    for cand in (8, 4, 2):
        if B % cand == 0 and B // cand >= 2:
            return cand
    return 1


def softmax_attention1(x_nchw, params, *, bblk=None):
    """Forward pass matching the PyTorch module. x_nchw: (B, C, H, W) f32."""
    B, C, H, W = x_nchw.shape
    HW = H * W
    R = _round_up8(C)

    # channels-on-sublanes layout: plain NCHW flatten, no transpose.
    x = x_nchw.reshape(B, C, HW).astype(jnp.float32)

    def pad_rows(a, rows):
        return jnp.pad(a, ((0, rows - a.shape[0]), (0, 0)))

    # Fused input-side conv weights/biases (cv1 | cv2 | cv3 | cv6), each block
    # padded to a sublane-tile-aligned row stride.
    w_in = jnp.concatenate([
        pad_rows(params['w1'], R), pad_rows(params['w2'], R),
        pad_rows(params['w3'], R), pad_rows(params['w6'], 8)], axis=0)      # (3R+8, C)
    b_in = jnp.concatenate([
        pad_rows(params['b1'][:, None], R), pad_rows(params['b2'][:, None], R),
        pad_rows(params['b3'][:, None], R), pad_rows(params['b6'][:, None], 8)],
        axis=0)                                                             # (3R+8, 1)

    # cv7, cv8, cv4, cv5 (indices 0..3); weights kept as [cout, cin].
    wcc = jnp.stack([params['w7'], params['w8'], params['w4'], params['w5']])          # (4, C, C)
    bcc = jnp.stack([params['b7'], params['b8'], params['b4'], params['b5']])[..., None]  # (4, C, 1)
    gamma = params['gamma'].reshape(C, 1)
    beta = params['beta'].reshape(C, 1)

    if bblk is None:
        bblk = _pick_bblk(B)
    grid = (B // bblk,)

    kernel = functools.partial(_softmax_attention1_kernel, W=W,
                               gn_eps=1e-5, norm_eps=1e-12)

    cost = pl.CostEstimate(
        flops=int(B * (4 * C * HW * HW + 2 * (3 * R + 8) * C * HW + 8 * C * C * HW)),
        transcendentals=int(B * (HW * HW + 2 * HW + 64)),
        bytes_accessed=int(4 * (B * C * HW + B * C
                                + (3 * R + 8) * (C + 1) + 4 * C * (C + 1) + 2 * C)),
    )

    out = pl.pallas_call(
        kernel,
        out_shape=jax.ShapeDtypeStruct((B, C, 1), jnp.float32),
        grid_spec=pltpu.PrefetchScalarGridSpec(
            num_scalar_prefetch=0,
            grid=grid,
            in_specs=[
                pl.BlockSpec((bblk, C, HW), lambda b: (b, 0, 0)),      # x
                pl.BlockSpec((3 * R + 8, C), lambda b: (0, 0)),        # fused conv W
                pl.BlockSpec((3 * R + 8, 1), lambda b: (0, 0)),        # fused conv b
                pl.BlockSpec((4, C, C), lambda b: (0, 0, 0)),          # cv7/cv8/cv4/cv5 W
                pl.BlockSpec((4, C, 1), lambda b: (0, 0, 0)),          # cv7/cv8/cv4/cv5 b
                pl.BlockSpec((C, 1), lambda b: (0, 0)),                # GroupNorm gamma
                pl.BlockSpec((C, 1), lambda b: (0, 0)),                # GroupNorm beta
            ],
            out_specs=pl.BlockSpec((bblk, C, 1), lambda b: (b, 0, 0)),
        ),
        compiler_params=pltpu.CompilerParams(
            dimension_semantics=("parallel",)),
        cost_estimate=cost,
    )(x, w_in, b_in, wcc, bcc, gamma, beta)
    return out.reshape(B, C)


def init_params(key, C):
    ks = jax.random.split(key, 18)
    p = {}
    for i, n in enumerate(('1', '2', '3', '4', '5', '7', '8')):
        p[f'w{n}'] = 0.2 * jax.random.normal(ks[i], (C, C), jnp.float32)
        p[f'b{n}'] = 0.1 * jax.random.normal(ks[7 + i], (C,), jnp.float32)
    p['w6'] = 0.2 * jax.random.normal(ks[14], (1, C), jnp.float32)
    p['b6'] = 0.1 * jax.random.normal(ks[15], (1,), jnp.float32)
    p['gamma'] = 1.0 + 0.1 * jax.random.normal(ks[16], (C,), jnp.float32)
    p['beta'] = 0.1 * jax.random.normal(ks[17], (C,), jnp.float32)
    return p


def reference(x, p):
    """Plain-JAX reimplementation of the PyTorch forward (NCHW) for checking."""
    B, C, H, W = x.shape
    HW = H * W

    def conv1x1(v, w, b):
        return (jnp.einsum('oc,bchw->bohw', w, v, precision='highest')
                + b[None, :, None, None])

    y1 = conv1x1(x, p['w1'], p['b1'])
    y2 = conv1x1(x, p['w2'], p['b2'])
    y3 = conv1x1(x, p['w3'], p['b3'])
    ye = conv1x1(x, p['w6'], p['b6'])
    ye_ = jax.nn.softmax(ye, axis=-1)
    y2f = y2.reshape(B, C, HW)
    y1f = y1.reshape(B, C, HW)
    c = jnp.einsum('bcp,bcq->bpq', y2f, y1f, precision='highest')
    cw = jax.nn.softmax(c, axis=-1)
    z = conv1x1(ye_ * y3, p['w7'], p['b7'])
    mu = jnp.mean(z, axis=(1, 2, 3), keepdims=True)
    var = jnp.mean((z - mu) ** 2, axis=(1, 2, 3), keepdims=True)
    zn = (z - mu) / jnp.sqrt(var + 1e-5)
    zn = zn * p['gamma'][None, :, None, None] + p['beta'][None, :, None, None]
    yee = conv1x1(zn, p['w8'], p['b8'])
    y3f = y3.reshape(B, C, HW)
    y_last = jnp.einsum('bcp,bpq->bcq', y3f, cw,
                        precision='highest').reshape(B, C, H, W)
    yla = y_last + yee
    avg = jnp.mean(yla, axis=(2, 3), keepdims=True)
    y4 = conv1x1(avg, p['w4'], p['b4'])
    nrm = jnp.sqrt(jnp.sum(y4 * y4, axis=1, keepdims=True))
    y4n = y4 / jnp.maximum(nrm, 1e-12)
    y5 = conv1x1(y4n, p['w5'], p['b5'])
    return y5.reshape(B, C)


if __name__ == "__main__":
    B, C, H, W = 2, 4, 16, 16
    key = jax.random.PRNGKey(0)
    kx, kp = jax.random.split(key)
    x = jax.random.normal(kx, (B, C, H, W), dtype=jnp.float32)
    params = init_params(kp, C)

    out = softmax_attention1(x, params)
    out = jax.block_until_ready(out)

    ref = reference(x, params)
    np.testing.assert_allclose(np.asarray(out), np.asarray(ref),
                               rtol=2e-2, atol=2e-2)
    print("KERNEL_OK")
</pallas_src>

<mosaic_0001>
module attributes {stable_mosaic.version = 11 : i64} {
  func.func @_softmax_attention1_kernel(%arg0: i32, %arg1: memref<1x4x256xf32, #tpu.memory_space<vmem>>, %arg2: memref<32x4xf32, #tpu.memory_space<vmem>>, %arg3: memref<32x1xf32, #tpu.memory_space<vmem>>, %arg4: memref<4x4x4xf32, #tpu.memory_space<vmem>>, %arg5: memref<4x4x1xf32, #tpu.memory_space<vmem>>, %arg6: memref<4x1xf32, #tpu.memory_space<vmem>>, %arg7: memref<4x1xf32, #tpu.memory_space<vmem>>, %arg8: memref<1x4x1xf32, #tpu.memory_space<vmem>>) attributes {dimension_semantics = [#tpu.dimension_semantics<parallel>], iteration_bounds = array<i64: 2>, scalar_prefetch = 0 : i64, scratch_operands = 0 : i64, tpu.core_type = #tpu.core_type<tc>, window_params = [{transform_indices = @transform_0, window_bounds = array<i64: 1, 4, 256>}, {pipeline_mode = #tpu.pipeline_mode<synchronous>, transform_indices = @transform_1, window_bounds = array<i64: 32, 4>}, {pipeline_mode = #tpu.pipeline_mode<synchronous>, transform_indices = @transform_2, window_bounds = array<i64: 32, 1>}, {pipeline_mode = #tpu.pipeline_mode<synchronous>, transform_indices = @transform_3, window_bounds = array<i64: 4, 4, 4>}, {pipeline_mode = #tpu.pipeline_mode<synchronous>, transform_indices = @transform_4, window_bounds = array<i64: 4, 4, 1>}, {pipeline_mode = #tpu.pipeline_mode<synchronous>, transform_indices = @transform_5, window_bounds = array<i64: 4, 1>}, {pipeline_mode = #tpu.pipeline_mode<synchronous>, transform_indices = @transform_6, window_bounds = array<i64: 4, 1>}, {transform_indices = @transform_7, window_bounds = array<i64: 1, 4, 1>}]} {
    %c0 = arith.constant 0 : index
    %c0_0 = arith.constant 0 : index
    %0 = vector.load %arg2[%c0, %c0_0] : memref<32x4xf32, #tpu.memory_space<vmem>>, vector<32x4xf32>
    %c0_1 = arith.constant 0 : index
    %c0_2 = arith.constant 0 : index
    %1 = vector.load %arg3[%c0_1, %c0_2] : memref<32x1xf32, #tpu.memory_space<vmem>>, vector<32x1xf32>
    %c0_3 = arith.constant 0 : index
    %c0_4 = arith.constant 0 : index
    %2 = vector.load %arg6[%c0_3, %c0_4] : memref<4x1xf32, #tpu.memory_space<vmem>>, vector<4x1xf32>
    %c0_5 = arith.constant 0 : index
    %c0_6 = arith.constant 0 : index
    %3 = vector.load %arg7[%c0_5, %c0_6] : memref<4x1xf32, #tpu.memory_space<vmem>>, vector<4x1xf32>
    %4 = tpu.iota {dimensions = array<i32: 0>} : vector<16x256xi32>
    %5 = tpu.iota {dimensions = array<i32: 1>} : vector<16x256xi32>
    %c16_i32 = arith.constant 16 : i32
    %6 = vector.broadcast %c16_i32 : i32 to vector<16x256xi32>
    %7 = arith.muli %4, %6 : vector<16x256xi32>
    %8 = arith.cmpi sge, %5, %7 : vector<16x256xi32>
    %c16_i32_7 = arith.constant 16 : i32
    %9 = vector.broadcast %c16_i32_7 : i32 to vector<16x256xi32>
    %10 = arith.addi %7, %9 : vector<16x256xi32>
    %11 = arith.cmpi slt, %5, %10 : vector<16x256xi32>
    %12 = arith.andi %8, %11 : vector<16x256xi1>
    %c0_8 = arith.constant 0 : index
    %c0_9 = arith.constant 0 : index
    %c0_10 = arith.constant 0 : index
    %13 = vector.load %arg1[%c0_8, %c0_9, %c0_10] : memref<1x4x256xf32, #tpu.memory_space<vmem>>, vector<1x4x256xf32>
    %14 = vector.shape_cast %13 : vector<1x4x256xf32> to vector<4x256xf32>
    %cst = arith.constant dense<0.000000e+00> : vector<32x256xf32>
    %15 = tpu.matmul %0, %14, %cst {dimension_numbers = #tpu.dot_dimension_numbers<[1], [0], [0], [1], [0, 0, 1, 1], [], []>} : vector<32x4xf32>, vector<4x256xf32>, vector<32x256xf32> -> vector<32x256xf32>
    %16 = vector.broadcast %1 : vector<32x1xf32> to vector<32x256xf32>
    %17 = arith.addf %15, %16 : vector<32x256xf32>
    %18 = vector.extract_strided_slice %17 {offsets = [0, 0], sizes = [4, 256], strides = [1, 1]} : vector<32x256xf32> to vector<4x256xf32>
    %19 = vector.extract_strided_slice %17 {offsets = [8, 0], sizes = [4, 256], strides = [1, 1]} : vector<32x256xf32> to vector<4x256xf32>
    %20 = vector.extract_strided_slice %17 {offsets = [16, 0], sizes = [4, 256], strides = [1, 1]} : vector<32x256xf32> to vector<4x256xf32>
    %21 = vector.extract_strided_slice %17 {offsets = [24, 0], sizes = [1, 256], strides = [1, 1]} : vector<32x256xf32> to vector<1x256xf32>
    %cst_11 = arith.constant 0xFF800000 : f32
    %22 = vector.shape_cast %21 : vector<1x256xf32> to vector<1x256xf32>
    %23 = vector.broadcast %22 : vector<1x256xf32> to vector<16x256xf32>
    %24 = vector.broadcast %cst_11 : f32 to vector<16x256xf32>
    %25 = arith.select %12, %23, %24 : vector<16x256xi1>, vector<16x256xf32>
    %cst_12 = arith.constant dense<0xFF800000> : vector<16xf32>
    %26 = vector.multi_reduction <maximumf>, %25, %cst_12 [1] : vector<16x256xf32> to vector<16xf32>
    %27 = vector.shape_cast %26 : vector<16xf32> to vector<16x1xf32>
    %cst_13 = arith.constant 0.000000e+00 : f32
    %28 = vector.shape_cast %27 : vector<16x1xf32> to vector<16x1xf32>
    %29 = vector.broadcast %28 : vector<16x1xf32> to vector<16x256xf32>
    %30 = vector.broadcast %cst_13 : f32 to vector<16x256xf32>
    %31 = arith.select %12, %29, %30 : vector<16x256xi1>, vector<16x256xf32>
    %cst_14 = arith.constant dense<0.000000e+00> : vector<256xf32>
    %32 = vector.multi_reduction <add>, %31, %cst_14 [0] : vector<16x256xf32> to vector<256xf32>
    %33 = vector.shape_cast %32 : vector<256xf32> to vector<1x256xf32>
    %34 = arith.subf %21, %33 : vector<1x256xf32>
    %35 = math.exp %34 : vector<1x256xf32>
    %cst_15 = arith.constant 0.000000e+00 : f32
    %36 = vector.shape_cast %35 : vector<1x256xf32> to vector<1x256xf32>
    %37 = vector.broadcast %36 : vector<1x256xf32> to vector<16x256xf32>
    %38 = vector.broadcast %cst_15 : f32 to vector<16x256xf32>
    %39 = arith.select %12, %37, %38 : vector<16x256xi1>, vector<16x256xf32>
    %cst_16 = arith.constant dense<0.000000e+00> : vector<16xf32>
    %40 = vector.multi_reduction <add>, %39, %cst_16 [1] : vector<16x256xf32> to vector<16xf32>
    %41 = vector.shape_cast %40 : vector<16xf32> to vector<16x1xf32>
    %42 = tpu.reciprocal %41 {approx = true} : vector<16x1xf32> -> vector<16x1xf32>
    %cst_17 = arith.constant 0.000000e+00 : f32
    %43 = vector.shape_cast %42 : vector<16x1xf32> to vector<16x1xf32>
    %44 = vector.broadcast %43 : vector<16x1xf32> to vector<16x256xf32>
    %45 = vector.broadcast %cst_17 : f32 to vector<16x256xf32>
    %46 = arith.select %12, %44, %45 : vector<16x256xi1>, vector<16x256xf32>
    %cst_18 = arith.constant dense<0.000000e+00> : vector<256xf32>
    %47 = vector.multi_reduction <add>, %46, %cst_18 [0] : vector<16x256xf32> to vector<256xf32>
    %48 = vector.shape_cast %47 : vector<256xf32> to vector<1x256xf32>
    %49 = arith.mulf %35, %48 : vector<1x256xf32>
    %50 = vector.broadcast %49 : vector<1x256xf32> to vector<4x256xf32>
    %51 = arith.mulf %50, %20 : vector<4x256xf32>
    %c0_19 = arith.constant 0 : index
    %c0_20 = arith.constant 0 : index
    %c0_21 = arith.constant 0 : index
    %52 = vector.load %arg4[%c0_19, %c0_20, %c0_21] : memref<4x4x4xf32, #tpu.memory_space<vmem>>, vector<1x4x4xf32>
    %53 = vector.shape_cast %52 : vector<1x4x4xf32> to vector<4x4xf32>
    %cst_22 = arith.constant dense<0.000000e+00> : vector<4x256xf32>
    %54 = tpu.matmul %53, %51, %cst_22 {dimension_numbers = #tpu.dot_dimension_numbers<[1], [0], [0], [1], [0, 0, 1, 1], [], []>} : vector<4x4xf32>, vector<4x256xf32>, vector<4x256xf32> -> vector<4x256xf32>
    %c0_23 = arith.constant 0 : index
    %c0_24 = arith.constant 0 : index
    %c0_25 = arith.constant 0 : index
    %55 = vector.load %arg5[%c0_23, %c0_24, %c0_25] : memref<4x4x1xf32, #tpu.memory_space<vmem>>, vector<1x4x1xf32>
    %56 = vector.shape_cast %55 : vector<1x4x1xf32> to vector<4x1xf32>
    %57 = vector.broadcast %56 : vector<4x1xf32> to vector<4x256xf32>
    %58 = arith.addf %54, %57 : vector<4x256xf32>
    %59 = vector.shape_cast %58 : vector<4x256xf32> to vector<1x4x256xf32>
    %cst_26 = arith.constant dense<0.000000e+00> : vector<1xf32>
    %60 = vector.multi_reduction <add>, %59, %cst_26 [1, 2] : vector<1x4x256xf32> to vector<1xf32>
    %61 = vector.shape_cast %60 : vector<1xf32> to vector<1x1x1xf32>
    %62 = vector.extract %61[0, 0, 0] : f32 from vector<1x1x1xf32>
    %63 = arith.mulf %58, %58 : vector<4x256xf32>
    %64 = vector.shape_cast %63 : vector<4x256xf32> to vector<1x4x256xf32>
    %cst_27 = arith.constant dense<0.000000e+00> : vector<1xf32>
    %65 = vector.multi_reduction <add>, %64, %cst_27 [1, 2] : vector<1x4x256xf32> to vector<1xf32>
    %66 = vector.shape_cast %65 : vector<1xf32> to vector<1x1x1xf32>
    %67 = vector.extract %66[0, 0, 0] : f32 from vector<1x1x1xf32>
    %cst_28 = arith.constant 1.024000e+03 : f32
    %68 = arith.divf %62, %cst_28 : f32
    %cst_29 = arith.constant 1.024000e+03 : f32
    %69 = arith.divf %67, %cst_29 : f32
    %70 = arith.mulf %68, %68 : f32
    %71 = arith.subf %69, %70 : f32
    %72 = vector.broadcast %68 : f32 to vector<4x256xf32>
    %73 = arith.subf %58, %72 : vector<4x256xf32>
    %cst_30 = arith.constant 9.99999974E-6 : f32
    %74 = arith.addf %71, %cst_30 : f32
    %75 = math.rsqrt %74 : f32
    %76 = vector.broadcast %75 : f32 to vector<4x256xf32>
    %77 = arith.mulf %73, %76 : vector<4x256xf32>
    %78 = vector.broadcast %2 : vector<4x1xf32> to vector<4x256xf32>
    %79 = arith.mulf %77, %78 : vector<4x256xf32>
    %80 = vector.broadcast %3 : vector<4x1xf32> to vector<4x256xf32>
    %81 = arith.addf %79, %80 : vector<4x256xf32>
    %c1 = arith.constant 1 : index
    %c0_31 = arith.constant 0 : index
    %c0_32 = arith.constant 0 : index
    %82 = vector.load %arg4[%c1, %c0_31, %c0_32] : memref<4x4x4xf32, #tpu.memory_space<vmem>>, vector<1x4x4xf32>
    %83 = vector.shape_cast %82 : vector<1x4x4xf32> to vector<4x4xf32>
    %cst_33 = arith.constant dense<0.000000e+00> : vector<4x256xf32>
    %84 = tpu.matmul %83, %81, %cst_33 {dimension_numbers = #tpu.dot_dimension_numbers<[1], [0], [0], [1], [0, 0, 1, 1], [], []>} : vector<4x4xf32>, vector<4x256xf32>, vector<4x256xf32> -> vector<4x256xf32>
    %c1_34 = arith.constant 1 : index
    %c0_35 = arith.constant 0 : index
    %c0_36 = arith.constant 0 : index
    %85 = vector.load %arg5[%c1_34, %c0_35, %c0_36] : memref<4x4x1xf32, #tpu.memory_space<vmem>>, vector<1x4x1xf32>
    %86 = vector.shape_cast %85 : vector<1x4x1xf32> to vector<4x1xf32>
    %87 = vector.broadcast %86 : vector<4x1xf32> to vector<4x256xf32>
    %88 = arith.addf %84, %87 : vector<4x256xf32>
    %89 = arith.truncf %18 : vector<4x256xf32> to vector<4x256xbf16>
    %90 = arith.truncf %19 : vector<4x256xf32> to vector<4x256xbf16>
    "tpu.trace_start"() <{level = 10 : i32, message = "cp,cq->pq"}> : () -> ()
    %cst_37 = arith.constant dense<0.000000e+00> : vector<256x256xf32>
    %91 = tpu.matmul %90, %89, %cst_37 {dimension_numbers = #tpu.dot_dimension_numbers<[0], [0], [1], [1], [0, 1, 1, 1], [], []>} : vector<4x256xbf16>, vector<4x256xbf16>, vector<256x256xf32> -> vector<256x256xf32>
    "tpu.trace_stop"() : () -> ()
    %cst_38 = arith.constant dense<0xFF800000> : vector<256xf32>
    %92 = vector.multi_reduction <maximumf>, %91, %cst_38 [1] : vector<256x256xf32> to vector<256xf32>
    %93 = vector.shape_cast %92 : vector<256xf32> to vector<256x1xf32>
    %94 = vector.broadcast %93 : vector<256x1xf32> to vector<256x256xf32>
    %95 = arith.subf %91, %94 : vector<256x256xf32>
    %96 = math.exp %95 : vector<256x256xf32>
    %cst_39 = arith.constant dense<0.000000e+00> : vector<256xf32>
    %97 = vector.multi_reduction <add>, %96, %cst_39 [1] : vector<256x256xf32> to vector<256xf32>
    %98 = vector.shape_cast %97 : vector<256xf32> to vector<256x1xf32>
    %99 = tpu.reciprocal %98 {approx = true} : vector<256x1xf32> -> vector<256x1xf32>
    %100 = vector.broadcast %99 : vector<256x1xf32> to vector<256x256xf32>
    %101 = arith.mulf %96, %100 : vector<256x256xf32>
    %102 = arith.truncf %101 : vector<256x256xf32> to vector<256x256xbf16>
    %103 = arith.truncf %20 : vector<4x256xf32> to vector<4x256xbf16>
    %cst_40 = arith.constant dense<0.000000e+00> : vector<4x256xf32>
    %104 = tpu.matmul %103, %102, %cst_40 {dimension_numbers = #tpu.dot_dimension_numbers<[1], [0], [0], [1], [0, 0, 1, 1], [], []>} : vector<4x256xbf16>, vector<256x256xbf16>, vector<4x256xf32> -> vector<4x256xf32>
    %105 = arith.addf %104, %88 : vector<4x256xf32>
    %cst_41 = arith.constant dense<0.000000e+00> : vector<4xf32>
    %106 = vector.multi_reduction <add>, %105, %cst_41 [1] : vector<4x256xf32> to vector<4xf32>
    %107 = vector.shape_cast %106 : vector<4xf32> to vector<4x1xf32>
    %cst_42 = arith.constant 2.560000e+02 : f32
    %108 = vector.broadcast %cst_42 : f32 to vector<4x1xf32>
    %109 = arith.divf %107, %108 : vector<4x1xf32>
    %c2 = arith.constant 2 : index
    %c0_43 = arith.constant 0 : index
    %c0_44 = arith.constant 0 : index
    %110 = vector.load %arg4[%c2, %c0_43, %c0_44] : memref<4x4x4xf32, #tpu.memory_space<vmem>>, vector<1x4x4xf32>
    %111 = vector.shape_cast %110 : vector<1x4x4xf32> to vector<4x4xf32>
    %cst_45 = arith.constant dense<0.000000e+00> : vector<4x1xf32>
    %112 = tpu.matmul %111, %109, %cst_45 {dimension_numbers = #tpu.dot_dimension_numbers<[1], [0], [0], [1], [0, 0, 1, 1], [], []>} : vector<4x4xf32>, vector<4x1xf32>, vector<4x1xf32> -> vector<4x1xf32>
    %c2_46 = arith.constant 2 : index
    %c0_47 = arith.constant 0 : index
    %c0_48 = arith.constant 0 : index
    %113 = vector.load %arg5[%c2_46, %c0_47, %c0_48] : memref<4x4x1xf32, #tpu.memory_space<vmem>>, vector<1x4x1xf32>
    %114 = vector.shape_cast %113 : vector<1x4x1xf32> to vector<4x1xf32>
    %115 = arith.addf %112, %114 : vector<4x1xf32>
    %116 = arith.mulf %115, %115 : vector<4x1xf32>
    %117 = vector.shape_cast %116 : vector<4x1xf32> to vector<1x4x1xf32>
    %cst_49 = arith.constant dense<0.000000e+00> : vector<1xf32>
    %118 = vector.multi_reduction <add>, %117, %cst_49 [1, 2] : vector<1x4x1xf32> to vector<1xf32>
    %119 = vector.shape_cast %118 : vector<1xf32> to vector<1x1x1xf32>
    %120 = vector.extract %119[0, 0, 0] : f32 from vector<1x1x1xf32>
    %121 = math.sqrt %120 : f32
    %cst_50 = arith.constant 9.99999996E-13 : f32
    %122 = arith.maximumf %121, %cst_50 : f32
    %123 = vector.broadcast %122 : f32 to vector<4x1xf32>
    %124 = arith.divf %115, %123 : vector<4x1xf32>
    %c3 = arith.constant 3 : index
    %c0_51 = arith.constant 0 : index
    %c0_52 = arith.constant 0 : index
    %125 = vector.load %arg4[%c3, %c0_51, %c0_52] : memref<4x4x4xf32, #tpu.memory_space<vmem>>, vector<1x4x4xf32>
    %126 = vector.shape_cast %125 : vector<1x4x4xf32> to vector<4x4xf32>
    %cst_53 = arith.constant dense<0.000000e+00> : vector<4x1xf32>
    %127 = tpu.matmul %126, %124, %cst_53 {dimension_numbers = #tpu.dot_dimension_numbers<[1], [0], [0], [1], [0, 0, 1, 1], [], []>} : vector<4x4xf32>, vector<4x1xf32>, vector<4x1xf32> -> vector<4x1xf32>
    %c3_54 = arith.constant 3 : index
    %c0_55 = arith.constant 0 : index
    %c0_56 = arith.constant 0 : index
    %128 = vector.load %arg5[%c3_54, %c0_55, %c0_56] : memref<4x4x1xf32, #tpu.memory_space<vmem>>, vector<1x4x1xf32>
    %129 = vector.shape_cast %128 : vector<1x4x1xf32> to vector<4x1xf32>
    %130 = arith.addf %127, %129 : vector<4x1xf32>
    %c0_57 = arith.constant 0 : index
    %c0_58 = arith.constant 0 : index
    %c0_59 = arith.constant 0 : index
    %131 = vector.load %arg8[%c0_57, %c0_58, %c0_59] : memref<1x4x1xf32, #tpu.memory_space<vmem>>, vector<1x4x1xf32>
    %132 = vector.shape_cast %131 : vector<1x4x1xf32> to vector<4x1xf32>
    %133 = vector.shape_cast %130 : vector<4x1xf32> to vector<1x4x1xf32>
    tpu.vector_store %arg8[%c0_57, %c0_58, %c0_59], %133 {strides = array<i32>} : memref<1x4x1xf32, #tpu.memory_space<vmem>>, vector<1x4x1xf32>,
    return
  }
  func.func @transform_0(%arg0: i32) -> (i32, i32, i32) {
    %c0_i32 = arith.constant 0 : i32
    %c0_i32_0 = arith.constant 0 : i32
    %c0_i32_1 = arith.constant 0 : i32
    return %arg0, %c0_i32, %c0_i32_0 : i32, i32, i32
  }
  func.func @transform_1(%arg0: i32) -> (i32, i32) {
    %c0_i32 = arith.constant 0 : i32
    %c0_i32_0 = arith.constant 0 : i32
    %c0_i32_1 = arith.constant 0 : i32
    return %c0_i32, %c0_i32_0 : i32, i32
  }
  func.func @transform_2(%arg0: i32) -> (i32, i32) {
    %c0_i32 = arith.constant 0 : i32
    %c0_i32_0 = arith.constant 0 : i32
    %c0_i32_1 = arith.constant 0 : i32
    return %c0_i32, %c0_i32_0 : i32, i32
  }
  func.func @transform_3(%arg0: i32) -> (i32, i32, i32) {
    %c0_i32 = arith.constant 0 : i32
    %c0_i32_0 = arith.constant 0 : i32
    %c0_i32_1 = arith.constant 0 : i32
    %c0_i32_2 = arith.constant 0 : i32
    return %c0_i32, %c0_i32_0, %c0_i32_1 : i32, i32, i32
  }
  func.func @transform_4(%arg0: i32) -> (i32, i32, i32) {
    %c0_i32 = arith.constant 0 : i32
    %c0_i32_0 = arith.constant 0 : i32
    %c0_i32_1 = arith.constant 0 : i32
    %c0_i32_2 = arith.constant 0 : i32
    return %c0_i32, %c0_i32_0, %c0_i32_1 : i32, i32, i32
  }
  func.func @transform_5(%arg0: i32) -> (i32, i32) {
    %c0_i32 = arith.constant 0 : i32
    %c0_i32_0 = arith.constant 0 : i32
    %c0_i32_1 = arith.constant 0 : i32
    return %c0_i32, %c0_i32_0 : i32, i32
  }
  func.func @transform_6(%arg0: i32) -> (i32, i32) {
    %c0_i32 = arith.constant 0 : i32
    %c0_i32_0 = arith.constant 0 : i32
    %c0_i32_1 = arith.constant 0 : i32
    return %c0_i32, %c0_i32_0 : i32, i32
  }
  func.func @transform_7(%arg0: i32) -> (i32, i32, i32) {
    %c0_i32 = arith.constant 0 : i32
    %c0_i32_0 = arith.constant 0 : i32
    %c0_i32_1 = arith.constant 0 : i32
    return %arg0, %c0_i32, %c0_i32_0 : i32, i32, i32
  }
}

</mosaic_0001>

<llo_original>
// kernel: tpu_custom_call.1
$region0: #{tpu_custom_call.1}
  #allocation0 [shape = 'u32[]', space=smem, size = 0x4, offset = 0x4, fixed_abs, tag = 'smem constant byte address 0x4 - core index']
  #allocation1 [shape = 'u32[72,128]{1,0:T(1,128)}', space=vmem, size = 0x9000, scoped, tag = 'internal scratch']
  %s0 = inlined_call_operand.vmem [shape: f32[2,4,256], index: 0, kind: input, shape index: {}]
  %s1 = inlined_call_operand.vmem [shape: f32[32,4], index: 1, kind: input, shape index: {}]
  %s2 = inlined_call_operand.vmem [shape: f32[32,1], index: 2, kind: input, shape index: {}]
  %s3 = inlined_call_operand.vmem [shape: f32[4,4,4], index: 3, kind: input, shape index: {}]
  %s4 = inlined_call_operand.vmem [shape: f32[4,4,1], index: 4, kind: input, shape index: {}]
  %s5 = inlined_call_operand.vmem [shape: f32[4,1], index: 5, kind: input, shape index: {}]
  %s6 = inlined_call_operand.vmem [shape: f32[4,1], index: 6, kind: input, shape index: {}]
  %s7 = inlined_call_operand.vmem [shape: f32[2,4,1], index: 7, kind: output, shape index: {}]
  %s8 = sld [smem:[#allocation0]]
  $region61: #{tpu_custom_call.1} parent=0
    _
  %s10 = ssub.s32 1, %s8
  %s11 = scalar_select 0, %s10, %s8
  loop: start=0, step=1, limit=4
  $region2: #{tpu_custom_call.1} parent=0 // loop_pre_header
    _
  $region3: #{tpu_custom_call.1} parent=0 // loop_header
    %s13 = sphi 0, %s17
    %p14 = scmp.ge.s32.totalorder %s13, 4
    %s23 = sphi 0, %s25
    %s26 = sphi 0, %s23
    %s27 = sphi 0, %s26
    %s43 = sphi 0, %s27
    %s47 = sphi 0, %s47
    %s49 = sphi 0, %s47
    %s50 = sphi 0, %s49
    %s64 = sphi 0, %s50
    %s68 = sphi 0, %s68
    %s70 = sphi 0, %s68
    %s71 = sphi 0, %s70
    %s85 = sphi 0, %s71
    %s89 = sphi 0, %s89
    %s91 = sphi 0, %s89
    %s92 = sphi 0, %s91
    %s106 = sphi 0, %s92
    %s110 = sphi 0, %s110
    %s112 = sphi 0, %s110
    %s113 = sphi 0, %s112
    %s127 = sphi 0, %s113
    %s131 = sphi 0, %s131
    %s133 = sphi 0, %s131
    %s134 = sphi 0, %s133
    %s148 = sphi 0, %s134
    %s152 = sphi 0, %s152
    %s154 = sphi 0, %s152
    %s155 = sphi 0, %s154
    %s169 = sphi 0, %s155
    %s175 = sphi 0, %s177
    %s178 = sphi 0, %s175
    %s179 = sphi 0, %s178
    %s195 = sphi 0, %s179
  $region4: #{tpu_custom_call.1} parent=0 // loop_header_branch
    %16 = sbr.rel (%p14) target = $region8
  $region5: #{tpu_custom_call.1} parent=0 // loop_body
    %s18 = ssub.s32 %s13, 1
    %s19 = ssub.s32 %s13, 2
    %s20 = sadd.s32 %s13, 1
    %s21 = ssub.s32 %s13, %s20
    %p22 = scmp.eq.s32.totalorder %s21, 0
    %s24 = sadd.s32 %s23, 1
    %s25 = scalar_select %p22, %s23, %s24
    %p28 = pneg %p22
    %p29 = scmp.eq.s32.totalorder %s13, 1
    %p30 = por %p28, %p29
    %p31 = scmp.ne.s32.totalorder %s23, %s26
    %p32 = scmp.eq.s32.totalorder %s13, 0
    %p33 = por %p31, %p32
    %p34 = scmp.ne.s32.totalorder %s23, %s26
    %p35 = scmp.eq.s32.totalorder %s18, 1
    %p36 = por %p34, %p35
    %p37 = scmp.ne.s32.totalorder %s26, %s27
    %p38 = scmp.eq.s32.totalorder %s18, 0
    %p39 = por %p37, %p38
    %p40 = scmp.ne.s32.totalorder %s26, %s27
    %p41 = scmp.eq.s32.totalorder %s19, 1
    %p42 = por %p40, %p41
    %p44 = scmp.ne.s32.totalorder %s27, %s43
    %p45 = scmp.eq.s32.totalorder %s19, 0
    %p46 = por %p44, %p45
    %s48 = sadd.s32 %s47, 1
    %p51 = scmp.eq.s32.totalorder %s13, 1
    %p52 = scmp.ne.s32.totalorder %s47, %s49
    %p53 = scmp.eq.s32.totalorder %s13, 0
    %p54 = por %p52, %p53
    %p55 = scmp.ne.s32.totalorder %s47, %s49
    %p56 = scmp.eq.s32.totalorder %s18, 1
    %p57 = por %p55, %p56
    %p58 = scmp.ne.s32.totalorder %s49, %s50
    %p59 = scmp.eq.s32.totalorder %s18, 0
    %p60 = por %p58, %p59
    %p61 = scmp.ne.s32.totalorder %s49, %s50
    %p62 = scmp.eq.s32.totalorder %s19, 1
    %p63 = por %p61, %p62
    %p65 = scmp.ne.s32.totalorder %s50, %s64
    %p66 = scmp.eq.s32.totalorder %s19, 0
    %p67 = por %p65, %p66
    %s69 = sadd.s32 %s68, 1
    %p72 = scmp.eq.s32.totalorder %s13, 1
    %p73 = scmp.ne.s32.totalorder %s68, %s70
    %p74 = scmp.eq.s32.totalorder %s13, 0
    %p75 = por %p73, %p74
    %p76 = scmp.ne.s32.totalorder %s68, %s70
    %p77 = scmp.eq.s32.totalorder %s18, 1
    %p78 = por %p76, %p77
    %p79 = scmp.ne.s32.totalorder %s70, %s71
    %p80 = scmp.eq.s32.totalorder %s18, 0
    %p81 = por %p79, %p80
    %p82 = scmp.ne.s32.totalorder %s70, %s71
    %p83 = scmp.eq.s32.totalorder %s19, 1
    %p84 = por %p82, %p83
    %p86 = scmp.ne.s32.totalorder %s71, %s85
    %p87 = scmp.eq.s32.totalorder %s19, 0
    %p88 = por %p86, %p87
    %s90 = sadd.s32 %s89, 1
    %p93 = scmp.eq.s32.totalorder %s13, 1
    %p94 = scmp.ne.s32.totalorder %s89, %s91
    %p95 = scmp.eq.s32.totalorder %s13, 0
    %p96 = por %p94, %p95
    %p97 = scmp.ne.s32.totalorder %s89, %s91
    %p98 = scmp.eq.s32.totalorder %s18, 1
    %p99 = por %p97, %p98
    %p100 = scmp.ne.s32.totalorder %s91, %s92
    %p101 = scmp.eq.s32.totalorder %s18, 0
    %p102 = por %p100, %p101
    %p103 = scmp.ne.s32.totalorder %s91, %s92
    %p104 = scmp.eq.s32.totalorder %s19, 1
    %p105 = por %p103, %p104
    %p107 = scmp.ne.s32.totalorder %s92, %s106
    %p108 = scmp.eq.s32.totalorder %s19, 0
    %p109 = por %p107, %p108
    %s111 = sadd.s32 %s110, 1
    %p114 = scmp.eq.s32.totalorder %s13, 1
    %p115 = scmp.ne.s32.totalorder %s110, %s112
    %p116 = scmp.eq.s32.totalorder %s13, 0
    %p117 = por %p115, %p116
    %p118 = scmp.ne.s32.totalorder %s110, %s112
    %p119 = scmp.eq.s32.totalorder %s18, 1
    %p120 = por %p118, %p119
    %p121 = scmp.ne.s32.totalorder %s112, %s113
    %p122 = scmp.eq.s32.totalorder %s18, 0
    %p123 = por %p121, %p122
    %p124 = scmp.ne.s32.totalorder %s112, %s113
    %p125 = scmp.eq.s32.totalorder %s19, 1
    %p126 = por %p124, %p125
    %p128 = scmp.ne.s32.totalorder %s113, %s127
    %p129 = scmp.eq.s32.totalorder %s19, 0
    %p130 = por %p128, %p129
    %s132 = sadd.s32 %s131, 1
    %p135 = scmp.eq.s32.totalorder %s13, 1
    %p136 = scmp.ne.s32.totalorder %s131, %s133
    %p137 = scmp.eq.s32.totalorder %s13, 0
    %p138 = por %p136, %p137
    %p139 = scmp.ne.s32.totalorder %s131, %s133
    %p140 = scmp.eq.s32.totalorder %s18, 1
    %p141 = por %p139, %p140
    %p142 = scmp.ne.s32.totalorder %s133, %s134
    %p143 = scmp.eq.s32.totalorder %s18, 0
    %p144 = por %p142, %p143
    %p145 = scmp.ne.s32.totalorder %s133, %s134
    %p146 = scmp.eq.s32.totalorder %s19, 1
    %p147 = por %p145, %p146
    %p149 = scmp.ne.s32.totalorder %s134, %s148
    %p150 = scmp.eq.s32.totalorder %s19, 0
    %p151 = por %p149, %p150
    %s153 = sadd.s32 %s152, 1
    %p156 = scmp.eq.s32.totalorder %s13, 1
    %p157 = scmp.ne.s32.totalorder %s152, %s154
    %p158 = scmp.eq.s32.totalorder %s13, 0
    %p159 = por %p157, %p158
    %p160 = scmp.ne.s32.totalorder %s152, %s154
    %p161 = scmp.eq.s32.totalorder %s18, 1
    %p162 = por %p160, %p161
    %p163 = scmp.ne.s32.totalorder %s154, %s155
    %p164 = scmp.eq.s32.totalorder %s18, 0
    %p165 = por %p163, %p164
    %p166 = scmp.ne.s32.totalorder %s154, %s155
    %p167 = scmp.eq.s32.totalorder %s19, 1
    %p168 = por %p166, %p167
    %p170 = scmp.ne.s32.totalorder %s155, %s169
    %p171 = scmp.eq.s32.totalorder %s19, 0
    %p172 = por %p170, %p171
    %s173 = ssub.s32 %s13, %s20
    %p174 = scmp.eq.s32.totalorder %s173, 0
    %s176 = sadd.s32 %s175, 1
    %s177 = scalar_select %p174, %s175, %s176
    %p180 = pneg %p174
    %p181 = scmp.eq.s32.totalorder %s13, 1
    %p182 = por %p180, %p181
    %p183 = scmp.ne.s32.totalorder %s175, %s178
    %p184 = scmp.eq.s32.totalorder %s13, 0
    %p185 = por %p183, %p184
    %p186 = scmp.ne.s32.totalorder %s175, %s178
    %p187 = scmp.eq.s32.totalorder %s18, 1
    %p188 = por %p186, %p187
    %p189 = scmp.ne.s32.totalorder %s178, %s179
    %p190 = scmp.eq.s32.totalorder %s18, 0
    %p191 = por %p189, %p190
    %p192 = scmp.ne.s32.totalorder %s178, %s179
    %p193 = scmp.eq.s32.totalorder %s19, 1
    %p194 = por %p192, %p193
    %p196 = scmp.ne.s32.totalorder %s179, %s195
    %p197 = scmp.eq.s32.totalorder %s19, 0
    %p198 = por %p196, %p197
    %p199 = scmp.le.s32.totalorder 1, %s13
    %p200 = scmp.lt.s32.totalorder %s13, 3
    %p201 = pnand %p199, %p200
    %p202 = pneg %p201
    // Predicated region
    $region9: #{tpu_custom_call.1} parent=5 // pred_check
      _
    $region10: #{tpu_custom_call.1} parent=5 // pred_check_branch
      %204 = sbr.rel (%p201) target = $region12
    $region11: #{tpu_custom_call.1} parent=5 // pred_region
      %s205 = ssub.s32 %s13, 1
      // Predicated region
      $region13: #{tpu_custom_call.1} parent=11 // pred_check
        %p206 = pneg %p60
      $region14: #{tpu_custom_call.1} parent=11 // pred_check_branch
        %208 = sbr.rel (%p206) target = $region16
      $region15: #{tpu_custom_call.1} parent=11 // pred_region
        _
      $region16: #{tpu_custom_call.1} parent=11 // pred_fallthru
        _
      // Predicated region
      $region17: #{tpu_custom_call.1} parent=11 // pred_check
        %p209 = pneg %p81
      $region18: #{tpu_custom_call.1} parent=11 // pred_check_branch
        %211 = sbr.rel (%p209) target = $region20
      $region19: #{tpu_custom_call.1} parent=11 // pred_region
        _
      $region20: #{tpu_custom_call.1} parent=11 // pred_fallthru
        _
      // Predicated region
      $region21: #{tpu_custom_call.1} parent=11 // pred_check
        %p212 = pneg %p102
      $region22: #{tpu_custom_call.1} parent=11 // pred_check_branch
        %214 = sbr.rel (%p212) target = $region24
      $region23: #{tpu_custom_call.1} parent=11 // pred_region
        _
      $region24: #{tpu_custom_call.1} parent=11 // pred_fallthru
        _
      // Predicated region
      $region25: #{tpu_custom_call.1} parent=11 // pred_check
        %p215 = pneg %p123
      $region26: #{tpu_custom_call.1} parent=11 // pred_check_branch
        %217 = sbr.rel (%p215) target = $region28
      $region27: #{tpu_custom_call.1} parent=11 // pred_region
        _
      $region28: #{tpu_custom_call.1} parent=11 // pred_fallthru
        _
      // Predicated region
      $region29: #{tpu_custom_call.1} parent=11 // pred_check
        %p218 = pneg %p144
      $region30: #{tpu_custom_call.1} parent=11 // pred_check_branch
        %220 = sbr.rel (%p218) target = $region32
      $region31: #{tpu_custom_call.1} parent=11 // pred_region
        _
      $region32: #{tpu_custom_call.1} parent=11 // pred_fallthru
        _
      // Predicated region
      $region33: #{tpu_custom_call.1} parent=11 // pred_check
        %p221 = pneg %p165
      $region34: #{tpu_custom_call.1} parent=11 // pred_check_branch
        %223 = sbr.rel (%p221) target = $region36
      $region35: #{tpu_custom_call.1} parent=11 // pred_region
        _
      $region36: #{tpu_custom_call.1} parent=11 // pred_fallthru
        _
    $region12: #{tpu_custom_call.1} parent=5 // pred_fallthru
      _
    %p224 = scmp.lt.s32.totalorder %s13, 2
    // Predicated region
    $region37: #{tpu_custom_call.1} parent=5 // pred_check
      %p225 = pneg %p224
    $region38: #{tpu_custom_call.1} parent=5 // pred_check_branch
      %227 = sbr.rel (%p225) target = $region40
    $region39: #{tpu_custom_call.1} parent=5 // pred_region
      // Predicated region
      $region41: #{tpu_custom_call.1} parent=39 // pred_check
        %p228 = pneg %p33
      $region42: #{tpu_custom_call.1} parent=39 // pred_check_branch
        %230 = sbr.rel (%p228) target = $region44
      $region43: #{tpu_custom_call.1} parent=39 // pred_region
        %p231 = scmp.lt.s32.totalorder %s13, 1
        %s232 = scalar_select %p231, %s13, 1
        %s233 = smul.addr %s232, 2
        %s234 = smul.addr %s233, 4
        %s235 = scalar_lea.vmem %s0, %s234
      $region44: #{tpu_custom_call.1} parent=39 // pred_fallthru
        _
    $region40: #{tpu_custom_call.1} parent=5 // pred_fallthru
      _
    %p236 = scmp.le.s32.totalorder 1, %s13
    %p237 = scmp.lt.s32.totalorder %s13, 3
    %p238 = pnand %p236, %p237
    %p239 = pneg %p238
    // Predicated region
    $region45: #{tpu_custom_call.1} parent=5 // pred_check
      _
    $region46: #{tpu_custom_call.1} parent=5 // pred_check_branch
      %241 = sbr.rel (%p238) target = $region48
    $region47: #{tpu_custom_call.1} parent=5 // pred_region
      %s242 = ssub.s32 %s13, 1
      %p243 = scmp.lt.s32.totalorder %s18, 1
      %s244 = scalar_select %p243, %s18, 1
      %s245 = smul.addr %s244, 2
      %s246 = smul.addr %s245, 4
      %s247 = scalar_lea.vmem %s0, %s246
      %p248 = pneg %p39
      %p249 = pneg %p36
      %p250 = pneg %p60
      %p251 = pneg %p57
      %p252 = pneg %p81
      %p253 = pneg %p78
      %p254 = pneg %p102
      %p255 = pneg %p99
      %p256 = pneg %p123
      %p257 = pneg %p120
      %p258 = pneg %p144
      %p259 = pneg %p141
      %p260 = pneg %p165
      %p261 = pneg %p162
      %p262 = pneg %p191
      %p263 = pneg %p188
      %p264 = scmp.lt.s32.totalorder %s18, 1
      %s265 = scalar_select %p264, %s18, 1
      %s266 = smul.addr %s265, 4
      %s267 = scalar_lea.vmem %s7, %s266
      %p268 = scmp.lt.s32.totalorder %s18, 1
      %s269 = scalar_select %p268, %s18, 1
      %s270 = smul.addr %s269, 2
      %s271 = smul.addr %s270, 4
      %s272 = scalar_lea.vmem %s0, %s271
      %p273 = scmp.lt.s32.totalorder %s18, 1
      %s274 = scalar_select %p273, %s18, 1
      %s275 = smul.addr %s274, 4
      %s276 = scalar_lea.vmem %s7, %s275
      %v278 = vld [vmem:[%s1] sm:$0xff]
      %v279 = vld [vmem:[%s1 + $0x8] sm:$0xff]
      %v280 = vld [vmem:[%s1 + $0x10] sm:$0xff]
      %v281 = vld [vmem:[%s1 + $0x18] sm:$0xff]
      %v282 = vld [vmem:[%s2] sm:$0xff]
      %v283 = vld [vmem:[%s2 + $0x8] sm:$0xff]
      %v284 = vld [vmem:[%s2 + $0x10] sm:$0xff]
      %v285 = vld [vmem:[%s2 + $0x18] sm:$0xff]
      %v286 = vld [vmem:[%s5] sm:$0xf]
      %v287 = vld [vmem:[%s6] sm:$0xf]
      %v288 = vlaneseq
      %v289 = vshrl.u32 %v288, 7
      %v290 = vadd.s32 %v289, 8
      %v291 = vlaneseq
      %v292 = vand.u32 %v291, 127
      %v293 = vadd.s32 %v292, 128
      %v294 = vmul.u32 %v289, 16
      %v295 = vmul.u32 %v290, 16
      %vm296 = vcmp.ge.s32.totalorder %v292, %v294
      %vm297 = vcmp.ge.s32.totalorder %v293, %v294
      %vm298 = vcmp.ge.s32.totalorder %v292, %v295
      %vm299 = vcmp.ge.s32.totalorder %v293, %v295
      %v300 = vadd.s32 %v294, 16
      %v301 = vadd.s32 %v295, 16
      %vm302 = vcmp.lt.s32.totalorder %v292, %v300
      %vm303 = vcmp.lt.s32.totalorder %v293, %v300
      %vm304 = vcmp.lt.s32.totalorder %v292, %v301
      %vm305 = vcmp.lt.s32.totalorder %v293, %v301
      %vm306 = vmand %vm296, %vm302
      %vm307 = vmand %vm297, %vm303
      %vm308 = vmand %vm298, %vm304
      %vm309 = vmand %vm299, %vm305
      %v310 = vld [vmem:[%s272] sm:$0xff]
      %312 = vset.pattern.permute.xlu0 0
      %313 = vperm.xlu0 %312, %v282
      %v314 = vpop.permute.xlu0 %313
      %317 = vset.pattern.permute.xlu0 0
      %318 = vperm.xlu0 %317, %v283
      %v319 = vpop.permute.xlu0 %318
      %322 = vset.pattern.permute.xlu0 0
      %323 = vperm.xlu0 %322, %v284
      %v324 = vpop.permute.xlu0 %323
      %327 = vset.pattern.permute.xlu0 0
      %328 = vperm.xlu0 %327, %v285
      %v329 = vpop.permute.xlu0 %328
      %332 = vst [vmem:[#allocation1] ss:$2 sm:$0xff] %v310
      %v333 = vld.sshfl [vmem:[#allocation1] sm:$0xff pattern:$0x75316420]
      %v334 = vld.sshfl [vmem:[#allocation1 + $0x8] sm:$0xff pattern:$0x75316420]
      %vm335 = vcmask 31744
      %v337 = vsel %vm335, %v278, 0
      %v340 = vsel %vm335, %v279, 0
      %v343 = vsel %vm335, %v280, 0
      %v346 = vsel %vm335, %v281, 0
      %vm348 = vcmask 1043456
      %v349 = vsel %vm348, %v333, 0
      %v351 = vsel %vm348, %v334, 0
      %353 = vmatpush.msra.mxu0 0.0
      %354 = vmatpush.msra.mxu0 0.0
      %355 = vmatpush.msra.mxu0 0.0
      %356 = vmatpush.msra.mxu0 0.0
      %357 = vmatpush.msra.mxu0 0.0
      %358 = vmatpush.msra.mxu0 0.0
      %359 = vmatpush.msra.mxu0 0.0
      %360 = vmatpush.msra.mxu0 0.0
      %361 = vmatpush.msra.mxu0 0.0
      %362 = vmatpush.msra.mxu0 0.0
      %363 = vmatpush.msra.mxu0 0.0
      %364 = vmatpush.msra.mxu0 0.0
      %365 = vmatpush.msra.mxu0 0.0
      %366 = vmatpush.msra.mxu0 0.0
      %367 = vmatpush.msra.mxu0 0.0
      %368 = vmatpush.msra.mxu0 %v349
      %369 = vmatmul.f32.gmra.mxu0 %v337
      %v370 = vpop.f32.mrf.mxu0
      %v371 = vadd.f32 %v314, %v370
      %372 = vmatmul.f32.gmra.mxu0 %v340
      %v373 = vpop.f32.mrf.mxu0
      %v374 = vadd.f32 %v319, %v373
      %375 = vmatmul.f32.gmra.mxu0 %v343
      %v376 = vpop.f32.mrf.mxu0
      %v377 = vadd.f32 %v324, %v376
      %378 = vmatmul.f32.gmra.mxu0 %v346
      %v379 = vpop.f32.mrf.mxu0
      %v380 = vadd.f32 %v329, %v379
      %381 = vdwg.mxu0
      %382 = vmatpush.msra.mxu0 0.0
      %383 = vmatpush.msra.mxu0 0.0
      %384 = vmatpush.msra.mxu0 0.0
      %385 = vmatpush.msra.mxu0 0.0
      %386 = vmatpush.msra.mxu0 0.0
      %387 = vmatpush.msra.mxu0 0.0
      %388 = vmatpush.msra.mxu0 0.0
      %389 = vmatpush.msra.mxu0 0.0
      %390 = vmatpush.msra.mxu0 0.0
      %391 = vmatpush.msra.mxu0 0.0
      %392 = vmatpush.msra.mxu0 0.0
      %393 = vmatpush.msra.mxu0 0.0
      %394 = vmatpush.msra.mxu0 0.0
      %395 = vmatpush.msra.mxu0 0.0
      %396 = vmatpush.msra.mxu0 0.0
      %397 = vmatpush.msra.mxu0 %v351
      %398 = vmatmul.f32.gmra.mxu0 %v337
      %v399 = vpop.f32.mrf.mxu0
      %v400 = vadd.f32 %v314, %v399
      %401 = vmatmul.f32.gmra.mxu0 %v340
      %v402 = vpop.f32.mrf.mxu0
      %v403 = vadd.f32 %v319, %v402
      %404 = vmatmul.f32.gmra.mxu0 %v343
      %v405 = vpop.f32.mrf.mxu0
      %v406 = vadd.f32 %v324, %v405
      %407 = vmatmul.f32.gmra.mxu0 %v346
      %v408 = vpop.f32.mrf.mxu0
      %v409 = vadd.f32 %v329, %v408
      %410 = vdwg.mxu0
      %v411 = vperm.slane %v380, 0
      %v412 = vperm.slane %v409, 0
      %v413 = vsel %vm306, %v411, -inf
      %v414 = vsel %vm307, %v412, -inf
      %v415 = vsel %vm308, %v411, -inf
      %v416 = vsel %vm309, %v412, -inf
      %v417 = vmax.f32 %v413, %v414
      %418 = vmax.xlane.f32.xlu0 %v417
      %v419 = vpop.xlane.xlu0 %418
      %v420 = vmax.f32 %v415, %v416
      %421 = vmax.xlane.f32.xlu0 %v420
      %v422 = vpop.xlane.xlu0 %421
      %v423 = vsel %vm306, %v419, 0.0
      %v424 = vsel %vm307, %v419, 0.0
      %v425 = vsel %vm308, %v422, 0.0
      %v426 = vsel %vm309, %v422, 0.0
      %v427 = vadd.f32 %v423, %v425
      %v428 = vrot.slane %v427, 4
      %v429 = vadd.f32 %v427, %v428
      %v430 = vrot.slane %v429, 2
      %v431 = vadd.f32 %v429, %v430
      %v432 = vrot.slane %v431, 1
      %v433 = vadd.f32 %v431, %v432
      %v434 = vadd.f32 %v424, %v426
      %v435 = vrot.slane %v434, 4
      %v436 = vadd.f32 %v434, %v435
      %v437 = vrot.slane %v436, 2
      %v438 = vadd.f32 %v436, %v437
      %v439 = vrot.slane %v438, 1
      %v440 = vadd.f32 %v438, %v439
      %v441 = vsub.f32 %v380, %v433
      %v442 = vsub.f32 %v409, %v440
      %v443 = vmul.f32 %v441, 1.442695
      %v444 = vpow.pop %v443
      %v445 = vmul.f32 %v442, 1.442695
      %v446 = vpow.pop %v445
      %v447 = vperm.slane %v444, 0
      %v448 = vperm.slane %v446, 0
      %v449 = vsel %vm306, %v447, 0.0
      %v450 = vsel %vm307, %v448, 0.0
      %v451 = vsel %vm308, %v447, 0.0
      %v452 = vsel %vm309, %v448, 0.0
      %v453 = vadd.f32 %v449, %v450
      %454 = vadd.xlane.f32.xlu0 %v453
      %v455 = vpop.xlane.xlu0 %454
      %v456 = vadd.f32 %v451, %v452
      %457 = vadd.xlane.f32.xlu0 %v456
      %v458 = vpop.xlane.xlu0 %457
      %v459 = vrcp.pop %v455
      %v460 = vrcp.pop %v458
      %v461 = vsel %vm306, %v459, 0.0
      %v462 = vsel %vm307, %v459, 0.0
      %v463 = vsel %vm308, %v460, 0.0
      %v464 = vsel %vm309, %v460, 0.0
      %v465 = vadd.f32 %v461, %v463
      %v466 = vrot.slane %v465, 4
      %v467 = vadd.f32 %v465, %v466
      %v468 = vrot.slane %v467, 2
      %v469 = vadd.f32 %v467, %v468
      %v470 = vrot.slane %v469, 1
      %v471 = vadd.f32 %v469, %v470
      %v472 = vadd.f32 %v462, %v464
      %v473 = vrot.slane %v472, 4
      %v474 = vadd.f32 %v472, %v473
      %v475 = vrot.slane %v474, 2
      %v476 = vadd.f32 %v474, %v475
      %v477 = vrot.slane %v476, 1
      %v478 = vadd.f32 %v476, %v477
      %v479 = vmul.f32 %v444, %v471
      %v480 = vmul.f32 %v446, %v478
      %v481 = vperm.slane %v479, 0
      %v482 = vperm.slane %v480, 0
      %v483 = vmul.f32 %v481, %v377
      %v484 = vmul.f32 %v482, %v406
      %v485 = vld [vmem:[%s3] sm:$0xf]
      %v486 = vld [vmem:[%s4] sm:$0xf]
      %488 = vset.pattern.permute.xlu0 0
      %489 = vperm.xlu0 %488, %v486
      %v490 = vpop.permute.xlu0 %489
      %v493 = vsel %vm335, %v485, 0
      %v496 = vsel %vm348, %v483, 0
      %v499 = vsel %vm348, %v484, 0
      %501 = vmatpush.msra.mxu0 0.0
      %502 = vmatpush.msra.mxu0 0.0
      %503 = vmatpush.msra.mxu0 0.0
      %504 = vmatpush.msra.mxu0 0.0
      %505 = vmatpush.msra.mxu0 0.0
      %506 = vmatpush.msra.mxu0 0.0
      %507 = vmatpush.msra.mxu0 0.0
      %508 = vmatpush.msra.mxu0 0.0
      %509 = vmatpush.msra.mxu0 0.0
      %510 = vmatpush.msra.mxu0 0.0
      %511 = vmatpush.msra.mxu0 0.0
      %512 = vmatpush.msra.mxu0 0.0
      %513 = vmatpush.msra.mxu0 0.0
      %514 = vmatpush.msra.mxu0 0.0
      %515 = vmatpush.msra.mxu0 0.0
      %516 = vmatpush.msra.mxu0 %v496
      %517 = vmatmul.f32.gmra.mxu0 %v493
      %v518 = vpop.f32.mrf.mxu0
      %v519 = vadd.f32 %v490, %v518
      %520 = vdwg.mxu0
      %521 = vmatpush.msra.mxu0 0.0
      %522 = vmatpush.msra.mxu0 0.0
      %523 = vmatpush.msra.mxu0 0.0
      %524 = vmatpush.msra.mxu0 0.0
      %525 = vmatpush.msra.mxu0 0.0
      %526 = vmatpush.msra.mxu0 0.0
      %527 = vmatpush.msra.mxu0 0.0
      %528 = vmatpush.msra.mxu0 0.0
      %529 = vmatpush.msra.mxu0 0.0
      %530 = vmatpush.msra.mxu0 0.0
      %531 = vmatpush.msra.mxu0 0.0
      %532 = vmatpush.msra.mxu0 0.0
      %533 = vmatpush.msra.mxu0 0.0
      %534 = vmatpush.msra.mxu0 0.0
      %535 = vmatpush.msra.mxu0 0.0
      %536 = vmatpush.msra.mxu0 %v499
      %537 = vmatmul.f32.gmra.mxu0 %v493
      %v538 = vpop.f32.mrf.mxu0
      %v539 = vadd.f32 %v490, %v538
      %540 = vdwg.mxu0
      %v541 = vsel %vm348, %v519, 0.0
      %v542 = vsel %vm348, %v539, 0.0
      %v543 = vadd.f32 %v541, %v542
      %544 = vadd.xlane.f32.xlu0 %v543
      %v545 = vpop.xlane.xlu0 %544
      %v546 = vrot.slane %v545, 4
      %v547 = vadd.f32 %v545, %v546
      %v548 = vrot.slane %v547, 2
      %v549 = vadd.f32 %v547, %v548
      %v550 = vrot.slane %v549, 1
      %v551 = vadd.f32 %v549, %v550
      %s552 = vtos %v551
      %v553 = vmul.f32 %v519, %v519
      %v554 = vmul.f32 %v539, %v539
      %v555 = vsel %vm348, %v553, 0.0
      %v556 = vsel %vm348, %v554, 0.0
      %v557 = vadd.f32 %v555, %v556
      %558 = vadd.xlane.f32.xlu0 %v557
      %v559 = vpop.xlane.xlu0 %558
      %v560 = vrot.slane %v559, 4
      %v561 = vadd.f32 %v559, %v560
      %v562 = vrot.slane %v561, 2
      %v563 = vadd.f32 %v561, %v562
      %v564 = vrot.slane %v563, 1
      %v565 = vadd.f32 %v563, %v564
      %s566 = vtos %v565
      %v567 = vrcp.pop 1024.0
      %v568 = vmul.f32 1024.0, %v567
      %v569 = vsub.f32 1.0, %v568
      %v570 = vmul.f32 %v567, %v569
      %v571 = vadd.f32 %v567, %v570
      %vm572 = vweird.f32 %v567
      %v573 = vsel %vm572, %v567, %v571
      %s574 = vtos %v573
      %s575 = smul.f32 %s552, %s574
      %v576 = vrcp.pop 1024.0
      %v577 = vmul.f32 1024.0, %v576
      %v578 = vsub.f32 1.0, %v577
      %v579 = vmul.f32 %v576, %v578
      %v580 = vadd.f32 %v576, %v579
      %vm581 = vweird.f32 %v576
      %v582 = vsel %vm581, %v576, %v580
      %s583 = vtos %v582
      %s584 = smul.f32 %s566, %s583
      %s585 = smul.f32 %s575, %s575
      %s586 = ssub.f32 %s584, %s585
      %v587 = vstv %s575
      %v588 = vsub.f32 %v519, %v587
      %v589 = vsub.f32 %v539, %v587
      %s590 = sadd.f32 %s586, 1e-05
      %v591 = vstv %s590
      %v592 = vrsqrt.pop %v591
      %v593 = vmul.f32 %v592, %v591
      %v594 = vmul.f32 %v593, %v592
      %v595 = vmul.f32 0.5, %v594
      %v596 = vsub.f32 1.5, %v595
      %v597 = vmul.f32 %v592, %v596
      %vm598 = vweird.f32 %v591
      %vm599 = vweird.f32 %v592
      %vm600 = vmor %vm598, %vm599
      %v601 = vsel %vm600, %v592, %v597
      %s602 = vtos %v601
      %v603 = vstv %s602
      %v604 = vmul.f32 %v588, %v603
      %v605 = vmul.f32 %v589, %v603
      %607 = vset.pattern.permute.xlu0 0
      %608 = vperm.xlu0 %607, %v286
      %v609 = vpop.permute.xlu0 %608
      %v611 = vmul.f32 %v604, %v609
      %v612 = vmul.f32 %v605, %v609
      %614 = vset.pattern.permute.xlu0 0
      %615 = vperm.xlu0 %614, %v287
      %v616 = vpop.permute.xlu0 %615
      %v618 = vadd.f32 %v611, %v616
      %v619 = vadd.f32 %v612, %v616
      %s620 = scalar_lea.vmem %s3, 4
      %v621 = vld [vmem:[%s620] sm:$0xf]
      %s622 = scalar_lea.vmem %s4, 4
      %v623 = vld [vmem:[%s622] sm:$0xf]
      %625 = vset.pattern.permute.xlu0 0
      %626 = vperm.xlu0 %625, %v623
      %v627 = vpop.permute.xlu0 %626
      %v630 = vsel %vm335, %v621, 0
      %v633 = vsel %vm348, %v618, 0
      %v636 = vsel %vm348, %v619, 0
      %638 = vmatpush.msra.mxu0 0.0
      %639 = vmatpush.msra.mxu0 0.0
      %640 = vmatpush.msra.mxu0 0.0
      %641 = vmatpush.msra.mxu0 0.0
      %642 = vmatpush.msra.mxu0 0.0
      %643 = vmatpush.msra.mxu0 0.0
      %644 = vmatpush.msra.mxu0 0.0
      %645 = vmatpush.msra.mxu0 0.0
      %646 = vmatpush.msra.mxu0 0.0
      %647 = vmatpush.msra.mxu0 0.0
      %648 = vmatpush.msra.mxu0 0.0
      %649 = vmatpush.msra.mxu0 0.0
      %650 = vmatpush.msra.mxu0 0.0
      %651 = vmatpush.msra.mxu0 0.0
      %652 = vmatpush.msra.mxu0 0.0
      %653 = vmatpush.msra.mxu0 %v633
      %654 = vmatmul.f32.gmra.mxu0 %v630
      %v655 = vpop.f32.mrf.mxu0
      %v656 = vadd.f32 %v627, %v655
      %657 = vdwg.mxu0
      %658 = vmatpush.msra.mxu0 0.0
      %659 = vmatpush.msra.mxu0 0.0
      %660 = vmatpush.msra.mxu0 0.0
      %661 = vmatpush.msra.mxu0 0.0
      %662 = vmatpush.msra.mxu0 0.0
      %663 = vmatpush.msra.mxu0 0.0
      %664 = vmatpush.msra.mxu0 0.0
      %665 = vmatpush.msra.mxu0 0.0
      %666 = vmatpush.msra.mxu0 0.0
      %667 = vmatpush.msra.mxu0 0.0
      %668 = vmatpush.msra.mxu0 0.0
      %669 = vmatpush.msra.mxu0 0.0
      %670 = vmatpush.msra.mxu0 0.0
      %671 = vmatpush.msra.mxu0 0.0
      %672 = vmatpush.msra.mxu0 0.0
      %673 = vmatpush.msra.mxu0 %v636
      %674 = vmatmul.f32.gmra.mxu0 %v630
      %v675 = vpop.f32.mrf.mxu0
      %v676 = vadd.f32 %v627, %v675
      %677 = vdwg.mxu0
      %v678 = vpack.c.bf16 %v371, %v371
      %v679 = vpack.c.bf16 %v400, %v400
      %v680 = vpack.c.bf16 %v374, %v374
      %v681 = vpack.c.bf16 %v403, %v403
      %682 = vxpose.binary.xlu0.c.b16.start [1/16] %v681, %v680, 128
      %683 = vxpose.binary.xlu0.c.b16.cont [2/16] 0, 0, 128
      %684 = vxpose.binary.xlu0.c.b16.cont [3/16] 0, 0, 128
      %685 = vxpose.binary.xlu0.c.b16.cont [4/16] 0, 0, 128
      %686 = vxpose.binary.xlu0.c.b16.cont [5/16] 0, 0, 128
      %687 = vxpose.binary.xlu0.c.b16.cont [6/16] 0, 0, 128
      %688 = vxpose.binary.xlu0.c.b16.cont [7/16] 0, 0, 128
      %689 = vxpose.binary.xlu0.c.b16.end [8/16] 0, 0, 128
      %v690 = vpop.trf.xlu0
      %v691 = vpop.trf.xlu0
      %v692 = vpop.trf.xlu0
      %v693 = vpop.trf.xlu0
      %v694 = vpop.trf.xlu0
      %v695 = vpop.trf.xlu0
      %v696 = vpop.trf.xlu0
      %v697 = vpop.trf.xlu0
      %v698 = vpop.trf.xlu0
      %v699 = vpop.trf.xlu0
      %v700 = vpop.trf.xlu0
      %v701 = vpop.trf.xlu0
      %v702 = vpop.trf.xlu0
      %v703 = vpop.trf.xlu0
      %v704 = vpop.trf.xlu0
      %v705 = vpop.trf.xlu0
      %v707 = vsel %vm335, %v690, 0
      %v710 = vsel %vm335, %v692, 0
      %v713 = vsel %vm335, %v694, 0
      %v716 = vsel %vm335, %v696, 0
      %v719 = vsel %vm335, %v698, 0
      %v722 = vsel %vm335, %v700, 0
      %v725 = vsel %vm335, %v702, 0
      %v728 = vsel %vm335, %v704, 0
      %v731 = vsel %vm335, %v691, 0
      %v734 = vsel %vm335, %v693, 0
      %v737 = vsel %vm335, %v695, 0
      %v740 = vsel %vm335, %v697, 0
      %v743 = vsel %vm335, %v699, 0
      %v746 = vsel %vm335, %v701, 0
      %v749 = vsel %vm335, %v703, 0
      %v752 = vsel %vm335, %v705, 0
      %vm754 = vcmask 1041408
      %v756 = vsel %vm754, %v678, 0
      %v759 = vsel %vm754, %v679, 0
      %761 = vmatpush.bf16.msra.mxu0 0
      %762 = vmatpush.bf16.msra.mxu0 0
      %763 = vmatpush.bf16.msra.mxu0 0
      %764 = vmatpush.bf16.msra.mxu0 0
      %765 = vmatpush.bf16.msra.mxu0 0
      %766 = vmatpush.bf16.msra.mxu0 0
      %767 = vmatpush.bf16.msra.mxu0 0
      %768 = vmatpush.bf16.msra.mxu0 %v756
      %769 = vmatmul.bf16.gmra.mxu0 %v707
      %v770 = vpop.f32.mrf.mxu0
      %v771 = vadd.f32 0.0, %v770
      %v772 = vpop.f32.mrf.mxu0
      %v773 = vadd.f32 0.0, %v772
      %774 = vmatmul.bf16.gmra.mxu0 %v710
      %v775 = vpop.f32.mrf.mxu0
      %v776 = vadd.f32 0.0, %v775
      %v777 = vpop.f32.mrf.mxu0
      %v778 = vadd.f32 0.0, %v777
      %779 = vmatmul.bf16.gmra.mxu0 %v713
      %v780 = vpop.f32.mrf.mxu0
      %v781 = vadd.f32 0.0, %v780
      %v782 = vpop.f32.mrf.mxu0
      %v783 = vadd.f32 0.0, %v782
      %784 = vmatmul.bf16.gmra.mxu0 %v716
      %v785 = vpop.f32.mrf.mxu0
      %v786 = vadd.f32 0.0, %v785
      %v787 = vpop.f32.mrf.mxu0
      %v788 = vadd.f32 0.0, %v787
      %789 = vmatmul.bf16.gmra.mxu0 %v719
      %v790 = vpop.f32.mrf.mxu0
      %v791 = vadd.f32 0.0, %v790
      %v792 = vpop.f32.mrf.mxu0
      %v793 = vadd.f32 0.0, %v792
      %794 = vmatmul.bf16.gmra.mxu0 %v722
      %v795 = vpop.f32.mrf.mxu0
      %v796 = vadd.f32 0.0, %v795
      %v797 = vpop.f32.mrf.mxu0
      %v798 = vadd.f32 0.0, %v797
      %799 = vmatmul.bf16.gmra.mxu0 %v725
      %v800 = vpop.f32.mrf.mxu0
      %v801 = vadd.f32 0.0, %v800
      %v802 = vpop.f32.mrf.mxu0
      %v803 = vadd.f32 0.0, %v802
      %804 = vmatmul.bf16.gmra.mxu0 %v728
      %v805 = vpop.f32.mrf.mxu0
      %v806 = vadd.f32 0.0, %v805
      %v807 = vpop.f32.mrf.mxu0
      %v808 = vadd.f32 0.0, %v807
      %809 = vmatmul.bf16.gmra.mxu0 %v731
      %v810 = vpop.f32.mrf.mxu0
      %v811 = vadd.f32 0.0, %v810
      %v812 = vpop.f32.mrf.mxu0
      %v813 = vadd.f32 0.0, %v812
      %814 = vmatmul.bf16.gmra.mxu0 %v734
      %v815 = vpop.f32.mrf.mxu0
      %v816 = vadd.f32 0.0, %v815
      %v817 = vpop.f32.mrf.mxu0
      %v818 = vadd.f32 0.0, %v817
      %819 = vmatmul.bf16.gmra.mxu0 %v737
      %v820 = vpop.f32.mrf.mxu0
      %v821 = vadd.f32 0.0, %v820
      %v822 = vpop.f32.mrf.mxu0
      %v823 = vadd.f32 0.0, %v822
      %824 = vmatmul.bf16.gmra.mxu0 %v740
      %v825 = vpop.f32.mrf.mxu0
      %v826 = vadd.f32 0.0, %v825
      %v827 = vpop.f32.mrf.mxu0
      %v828 = vadd.f32 0.0, %v827
      %829 = vmatmul.bf16.gmra.mxu0 %v743
      %v830 = vpop.f32.mrf.mxu0
      %v831 = vadd.f32 0.0, %v830
      %v832 = vpop.f32.mrf.mxu0
      %v833 = vadd.f32 0.0, %v832
      %834 = vmatmul.bf16.gmra.mxu0 %v746
      %v835 = vpop.f32.mrf.mxu0
      %v836 = vadd.f32 0.0, %v835
      %v837 = vpop.f32.mrf.mxu0
      %v838 = vadd.f32 0.0, %v837
      %839 = vmatmul.bf16.gmra.mxu0 %v749
      %v840 = vpop.f32.mrf.mxu0
      %v841 = vadd.f32 0.0, %v840
      %v842 = vpop.f32.mrf.mxu0
      %v843 = vadd.f32 0.0, %v842
      %844 = vmatmul.bf16.gmra.mxu0 %v752
      %v845 = vpop.f32.mrf.mxu0
      %v846 = vadd.f32 0.0, %v845
      %v847 = vpop.f32.mrf.mxu0
      %v848 = vadd.f32 0.0, %v847
      %849 = vdwg.mxu0
      %850 = vmatpush.bf16.msra.mxu0 0
      %851 = vmatpush.bf16.msra.mxu0 0
      %852 = vmatpush.bf16.msra.mxu0 0
      %853 = vmatpush.bf16.msra.mxu0 0
      %854 = vmatpush.bf16.msra.mxu0 0
      %855 = vmatpush.bf16.msra.mxu0 0
      %856 = vmatpush.bf16.msra.mxu0 0
      %857 = vmatpush.bf16.msra.mxu0 %v759
      %858 = vmatmul.bf16.gmra.mxu0 %v707
      %v859 = vpop.f32.mrf.mxu0
      %v860 = vadd.f32 0.0, %v859
      %v861 = vpop.f32.mrf.mxu0
      %v862 = vadd.f32 0.0, %v861
      %863 = vmatmul.bf16.gmra.mxu0 %v710
      %v864 = vpop.f32.mrf.mxu0
      %v865 = vadd.f32 0.0, %v864
      %v866 = vpop.f32.mrf.mxu0
      %v867 = vadd.f32 0.0, %v866
      %868 = vmatmul.bf16.gmra.mxu0 %v713
      %v869 = vpop.f32.mrf.mxu0
      %v870 = vadd.f32 0.0, %v869
      %v871 = vpop.f32.mrf.mxu0
      %v872 = vadd.f32 0.0, %v871
      %873 = vmatmul.bf16.gmra.mxu0 %v716
      %v874 = vpop.f32.mrf.mxu0
      %v875 = vadd.f32 0.0, %v874
      %v876 = vpop.f32.mrf.mxu0
      %v877 = vadd.f32 0.0, %v876
      %878 = vmatmul.bf16.gmra.mxu0 %v719
      %v879 = vpop.f32.mrf.mxu0
      %v880 = vadd.f32 0.0, %v879
      %v881 = vpop.f32.mrf.mxu0
      %v882 = vadd.f32 0.0, %v881
      %883 = vmatmul.bf16.gmra.mxu0 %v722
      %v884 = vpop.f32.mrf.mxu0
      %v885 = vadd.f32 0.0, %v884
      %v886 = vpop.f32.mrf.mxu0
      %v887 = vadd.f32 0.0, %v886
      %888 = vmatmul.bf16.gmra.mxu0 %v725
      %v889 = vpop.f32.mrf.mxu0
      %v890 = vadd.f32 0.0, %v889
      %v891 = vpop.f32.mrf.mxu0
      %v892 = vadd.f32 0.0, %v891
      %893 = vmatmul.bf16.gmra.mxu0 %v728
      %v894 = vpop.f32.mrf.mxu0
      %v895 = vadd.f32 0.0, %v894
      %v896 = vpop.f32.mrf.mxu0
      %v897 = vadd.f32 0.0, %v896
      %898 = vmatmul.bf16.gmra.mxu0 %v731
      %v899 = vpop.f32.mrf.mxu0
      %v900 = vadd.f32 0.0, %v899
      %v901 = vpop.f32.mrf.mxu0
      %v902 = vadd.f32 0.0, %v901
      %903 = vmatmul.bf16.gmra.mxu0 %v734
      %v904 = vpop.f32.mrf.mxu0
      %v905 = vadd.f32 0.0, %v904
      %v906 = vpop.f32.mrf.mxu0
      %v907 = vadd.f32 0.0, %v906
      %908 = vmatmul.bf16.gmra.mxu0 %v737
      %v909 = vpop.f32.mrf.mxu0
      %v910 = vadd.f32 0.0, %v909
      %v911 = vpop.f32.mrf.mxu0
      %v912 = vadd.f32 0.0, %v911
      %913 = vmatmul.bf16.gmra.mxu0 %v740
      %v914 = vpop.f32.mrf.mxu0
      %v915 = vadd.f32 0.0, %v914
      %v916 = vpop.f32.mrf.mxu0
      %v917 = vadd.f32 0.0, %v916
      %918 = vmatmul.bf16.gmra.mxu0 %v743
      %v919 = vpop.f32.mrf.mxu0
      %v920 = vadd.f32 0.0, %v919
      %v921 = vpop.f32.mrf.mxu0
      %v922 = vadd.f32 0.0, %v921
      %923 = vmatmul.bf16.gmra.mxu0 %v746
      %v924 = vpop.f32.mrf.mxu0
      %v925 = vadd.f32 0.0, %v924
      %v926 = vpop.f32.mrf.mxu0
      %v927 = vadd.f32 0.0, %v926
      %928 = vmatmul.bf16.gmra.mxu0 %v749
      %v929 = vpop.f32.mrf.mxu0
      %v930 = vadd.f32 0.0, %v929
      %v931 = vpop.f32.mrf.mxu0
      %v932 = vadd.f32 0.0, %v931
      %933 = vmatmul.bf16.gmra.mxu0 %v752
      %v934 = vpop.f32.mrf.mxu0
      %v935 = vadd.f32 0.0, %v934
      %v936 = vpop.f32.mrf.mxu0
      %v937 = vadd.f32 0.0, %v936
      %938 = vdwg.mxu0
      %v939 = vmax.f32 %v771, %v860
      %940 = vmax.xlane.f32.xlu0 %v939
      %v941 = vpop.xlane.xlu0 %940
      %v942 = vmax.f32 %v773, %v862
      %943 = vmax.xlane.f32.xlu0 %v942
      %v944 = vpop.xlane.xlu0 %943
      %v945 = vmax.f32 %v776, %v865
      %946 = vmax.xlane.f32.xlu0 %v945
      %v947 = vpop.xlane.xlu0 %946
      %v948 = vmax.f32 %v778, %v867
      %949 = vmax.xlane.f32.xlu0 %v948
      %v950 = vpop.xlane.xlu0 %949
      %v951 = vmax.f32 %v781, %v870
      %952 = vmax.xlane.f32.xlu0 %v951
      %v953 = vpop.xlane.xlu0 %952
      %v954 = vmax.f32 %v783, %v872
      %955 = vmax.xlane.f32.xlu0 %v954
      %v956 = vpop.xlane.xlu0 %955
      %v957 = vmax.f32 %v786, %v875
      %958 = vmax.xlane.f32.xlu0 %v957
      %v959 = vpop.xlane.xlu0 %958
      %v960 = vmax.f32 %v788, %v877
      %961 = vmax.xlane.f32.xlu0 %v960
      %v962 = vpop.xlane.xlu0 %961
      %v963 = vmax.f32 %v791, %v880
      %964 = vmax.xlane.f32.xlu0 %v963
      %v965 = vpop.xlane.xlu0 %964
      %v966 = vmax.f32 %v793, %v882
      %967 = vmax.xlane.f32.xlu0 %v966
      %v968 = vpop.xlane.xlu0 %967
      %v969 = vmax.f32 %v796, %v885
      %970 = vmax.xlane.f32.xlu0 %v969
      %v971 = vpop.xlane.xlu0 %970
      %v972 = vmax.f32 %v798, %v887
      %973 = vmax.xlane.f32.xlu0 %v972
      %v974 = vpop.xlane.xlu0 %973
      %v975 = vmax.f32 %v801, %v890
      %976 = vmax.xlane.f32.xlu0 %v975
      %v977 = vpop.xlane.xlu0 %976
      %v978 = vmax.f32 %v803, %v892
      %979 = vmax.xlane.f32.xlu0 %v978
      %v980 = vpop.xlane.xlu0 %979
      %v981 = vmax.f32 %v806, %v895
      %982 = vmax.xlane.f32.xlu0 %v981
      %v983 = vpop.xlane.xlu0 %982
      %v984 = vmax.f32 %v808, %v897
      %985 = vmax.xlane.f32.xlu0 %v984
      %v986 = vpop.xlane.xlu0 %985
      %v987 = vmax.f32 %v811, %v900
      %988 = vmax.xlane.f32.xlu0 %v987
      %v989 = vpop.xlane.xlu0 %988
      %v990 = vmax.f32 %v813, %v902
      %991 = vmax.xlane.f32.xlu0 %v990
      %v992 = vpop.xlane.xlu0 %991
      %v993 = vmax.f32 %v816, %v905
      %994 = vmax.xlane.f32.xlu0 %v993
      %v995 = vpop.xlane.xlu0 %994
      %v996 = vmax.f32 %v818, %v907
      %997 = vmax.xlane.f32.xlu0 %v996
      %v998 = vpop.xlane.xlu0 %997
      %v999 = vmax.f32 %v821, %v910
      %1000 = vmax.xlane.f32.xlu0 %v999
      %v1001 = vpop.xlane.xlu0 %1000
      %v1002 = vmax.f32 %v823, %v912
      %1003 = vmax.xlane.f32.xlu0 %v1002
      %v1004 = vpop.xlane.xlu0 %1003
      %v1005 = vmax.f32 %v826, %v915
      %1006 = vmax.xlane.f32.xlu0 %v1005
      %v1007 = vpop.xlane.xlu0 %1006
      %v1008 = vmax.f32 %v828, %v917
      %1009 = vmax.xlane.f32.xlu0 %v1008
      %v1010 = vpop.xlane.xlu0 %1009
      %v1011 = vmax.f32 %v831, %v920
      %1012 = vmax.xlane.f32.xlu0 %v1011
      %v1013 = vpop.xlane.xlu0 %1012
      %v1014 = vmax.f32 %v833, %v922
      %1015 = vmax.xlane.f32.xlu0 %v1014
      %v1016 = vpop.xlane.xlu0 %1015
      %v1017 = vmax.f32 %v836, %v925
      %1018 = vmax.xlane.f32.xlu0 %v1017
      %v1019 = vpop.xlane.xlu0 %1018
      %v1020 = vmax.f32 %v838, %v927
      %1021 = vmax.xlane.f32.xlu0 %v1020
      %v1022 = vpop.xlane.xlu0 %1021
      %v1023 = vmax.f32 %v841, %v930
      %1024 = vmax.xlane.f32.xlu0 %v1023
      %v1025 = vpop.xlane.xlu0 %1024
      %v1026 = vmax.f32 %v843, %v932
      %1027 = vmax.xlane.f32.xlu0 %v1026
      %v1028 = vpop.xlane.xlu0 %1027
      %v1029 = vmax.f32 %v846, %v935
      %1030 = vmax.xlane.f32.xlu0 %v1029
      %v1031 = vpop.xlane.xlu0 %1030
      %v1032 = vmax.f32 %v848, %v937
      %1033 = vmax.xlane.f32.xlu0 %v1032
      %v1034 = vpop.xlane.xlu0 %1033
      %v1035 = vsub.f32 %v771, %v941
      %v1036 = vsub.f32 %v860, %v941
      %v1037 = vsub.f32 %v773, %v944
      %v1038 = vsub.f32 %v862, %v944
      %v1039 = vsub.f32 %v776, %v947
      %v1040 = vsub.f32 %v865, %v947
      %v1041 = vsub.f32 %v778, %v950
      %v1042 = vsub.f32 %v867, %v950
      %v1043 = vsub.f32 %v781, %v953
      %v1044 = vsub.f32 %v870, %v953
      %v1045 = vsub.f32 %v783, %v956
      %v1046 = vsub.f32 %v872, %v956
      %v1047 = vsub.f32 %v786, %v959
      %v1048 = vsub.f32 %v875, %v959
      %v1049 = vsub.f32 %v788, %v962
      %v1050 = vsub.f32 %v877, %v962
      %v1051 = vsub.f32 %v791, %v965
      %v1052 = vsub.f32 %v880, %v965
      %v1053 = vsub.f32 %v793, %v968
      %v1054 = vsub.f32 %v882, %v968
      %v1055 = vsub.f32 %v796, %v971
      %v1056 = vsub.f32 %v885, %v971
      %v1057 = vsub.f32 %v798, %v974
      %v1058 = vsub.f32 %v887, %v974
      %v1059 = vsub.f32 %v801, %v977
      %v1060 = vsub.f32 %v890, %v977
      %v1061 = vsub.f32 %v803, %v980
      %v1062 = vsub.f32 %v892, %v980
      %v1063 = vsub.f32 %v806, %v983
      %v1064 = vsub.f32 %v895, %v983
      %v1065 = vsub.f32 %v808, %v986
      %v1066 = vsub.f32 %v897, %v986
      %v1067 = vsub.f32 %v811, %v989
      %v1068 = vsub.f32 %v900, %v989
      %v1069 = vsub.f32 %v813, %v992
      %v1070 = vsub.f32 %v902, %v992
      %v1071 = vsub.f32 %v816, %v995
      %v1072 = vsub.f32 %v905, %v995
      %v1073 = vsub.f32 %v818, %v998
      %v1074 = vsub.f32 %v907, %v998
      %v1075 = vsub.f32 %v821, %v1001
      %v1076 = vsub.f32 %v910, %v1001
      %v1077 = vsub.f32 %v823, %v1004
      %v1078 = vsub.f32 %v912, %v1004
      %v1079 = vsub.f32 %v826, %v1007
      %v1080 = vsub.f32 %v915, %v1007
      %v1081 = vsub.f32 %v828, %v1010
      %v1082 = vsub.f32 %v917, %v1010
      %v1083 = vsub.f32 %v831, %v1013
      %v1084 = vsub.f32 %v920, %v1013
      %v1085 = vsub.f32 %v833, %v1016
      %v1086 = vsub.f32 %v922, %v1016
      %v1087 = vsub.f32 %v836, %v1019
      %v1088 = vsub.f32 %v925, %v1019
      %v1089 = vsub.f32 %v838, %v1022
      %v1090 = vsub.f32 %v927, %v1022
      %v1091 = vsub.f32 %v841, %v1025
      %v1092 = vsub.f32 %v930, %v1025
      %v1093 = vsub.f32 %v843, %v1028
      %v1094 = vsub.f32 %v932, %v1028
      %v1095 = vsub.f32 %v846, %v1031
      %v1096 = vsub.f32 %v935, %v1031
      %v1097 = vsub.f32 %v848, %v1034
      %v1098 = vsub.f32 %v937, %v1034
      %v1099 = vmul.f32 %v1035, 1.442695
      %v1100 = vpow.pop %v1099
      %v1101 = vmul.f32 %v1036, 1.442695
      %v1102 = vpow.pop %v1101
      %v1103 = vmul.f32 %v1037, 1.442695
      %v1104 = vpow.pop %v1103
      %v1105 = vmul.f32 %v1038, 1.442695
      %v1106 = vpow.pop %v1105
      %v1107 = vmul.f32 %v1039, 1.442695
      %v1108 = vpow.pop %v1107
      %v1109 = vmul.f32 %v1040, 1.442695
      %v1110 = vpow.pop %v1109
      %v1111 = vmul.f32 %v1041, 1.442695
      %v1112 = vpow.pop %v1111
      %v1113 = vmul.f32 %v1042, 1.442695
      %v1114 = vpow.pop %v1113
      %v1115 = vmul.f32 %v1043, 1.442695
      %v1116 = vpow.pop %v1115
      %v1117 = vmul.f32 %v1044, 1.442695
      %v1118 = vpow.pop %v1117
      %v1119 = vmul.f32 %v1045, 1.442695
      %v1120 = vpow.pop %v1119
      %v1121 = vmul.f32 %v1046, 1.442695
      %v1122 = vpow.pop %v1121
      %v1123 = vmul.f32 %v1047, 1.442695
      %v1124 = vpow.pop %v1123
      %v1125 = vmul.f32 %v1048, 1.442695
      %v1126 = vpow.pop %v1125
      %v1127 = vmul.f32 %v1049, 1.442695
      %v1128 = vpow.pop %v1127
      %v1129 = vmul.f32 %v1050, 1.442695
      %v1130 = vpow.pop %v1129
      %v1131 = vmul.f32 %v1051, 1.442695
      %v1132 = vpow.pop %v1131
      %v1133 = vmul.f32 %v1052, 1.442695
      %v1134 = vpow.pop %v1133
      %v1135 = vmul.f32 %v1053, 1.442695
      %v1136 = vpow.pop %v1135
      %v1137 = vmul.f32 %v1054, 1.442695
      %v1138 = vpow.pop %v1137
      %v1139 = vmul.f32 %v1055, 1.442695
      %v1140 = vpow.pop %v1139
      %v1141 = vmul.f32 %v1056, 1.442695
      %v1142 = vpow.pop %v1141
      %v1143 = vmul.f32 %v1057, 1.442695
      %v1144 = vpow.pop %v1143
      %v1145 = vmul.f32 %v1058, 1.442695
      %v1146 = vpow.pop %v1145
      %v1147 = vmul.f32 %v1059, 1.442695
      %v1148 = vpow.pop %v1147
      %v1149 = vmul.f32 %v1060, 1.442695
      %v1150 = vpow.pop %v1149
      %v1151 = vmul.f32 %v1061, 1.442695
      %v1152 = vpow.pop %v1151
      %v1153 = vmul.f32 %v1062, 1.442695
      %v1154 = vpow.pop %v1153
      %v1155 = vmul.f32 %v1063, 1.442695
      %v1156 = vpow.pop %v1155
      %v1157 = vmul.f32 %v1064, 1.442695
      %v1158 = vpow.pop %v1157
      %v1159 = vmul.f32 %v1065, 1.442695
      %v1160 = vpow.pop %v1159
      %v1161 = vmul.f32 %v1066, 1.442695
      %v1162 = vpow.pop %v1161
      %v1163 = vmul.f32 %v1067, 1.442695
      %v1164 = vpow.pop %v1163
      %v1165 = vmul.f32 %v1068, 1.442695
      %v1166 = vpow.pop %v1165
      %v1167 = vmul.f32 %v1069, 1.442695
      %v1168 = vpow.pop %v1167
      %v1169 = vmul.f32 %v1070, 1.442695
      %v1170 = vpow.pop %v1169
      %v1171 = vmul.f32 %v1071, 1.442695
      %v1172 = vpow.pop %v1171
      %v1173 = vmul.f32 %v1072, 1.442695
      %v1174 = vpow.pop %v1173
      %v1175 = vmul.f32 %v1073, 1.442695
      %v1176 = vpow.pop %v1175
      %v1177 = vmul.f32 %v1074, 1.442695
      %v1178 = vpow.pop %v1177
      %v1179 = vmul.f32 %v1075, 1.442695
      %v1180 = vpow.pop %v1179
      %v1181 = vmul.f32 %v1076, 1.442695
      %v1182 = vpow.pop %v1181
      %v1183 = vmul.f32 %v1077, 1.442695
      %v1184 = vpow.pop %v1183
      %v1185 = vmul.f32 %v1078, 1.442695
      %v1186 = vpow.pop %v1185
      %v1187 = vmul.f32 %v1079, 1.442695
      %v1188 = vpow.pop %v1187
      %v1189 = vmul.f32 %v1080, 1.442695
      %v1190 = vpow.pop %v1189
      %v1191 = vmul.f32 %v1081, 1.442695
      %v1192 = vpow.pop %v1191
      %v1193 = vmul.f32 %v1082, 1.442695
      %v1194 = vpow.pop %v1193
      %v1195 = vmul.f32 %v1083, 1.442695
      %v1196 = vpow.pop %v1195
      %v1197 = vmul.f32 %v1084, 1.442695
      %v1198 = vpow.pop %v1197
      %v1199 = vmul.f32 %v1085, 1.442695
      %v1200 = vpow.pop %v1199
      %v1201 = vmul.f32 %v1086, 1.442695
      %v1202 = vpow.pop %v1201
      %v1203 = vmul.f32 %v1087, 1.442695
      %v1204 = vpow.pop %v1203
      %v1205 = vmul.f32 %v1088, 1.442695
      %v1206 = vpow.pop %v1205
      %v1207 = vmul.f32 %v1089, 1.442695
      %v1208 = vpow.pop %v1207
      %v1209 = vmul.f32 %v1090, 1.442695
      %v1210 = vpow.pop %v1209
      %v1211 = vmul.f32 %v1091, 1.442695
      %v1212 = vpow.pop %v1211
      %v1213 = vmul.f32 %v1092, 1.442695
      %v1214 = vpow.pop %v1213
      %v1215 = vmul.f32 %v1093, 1.442695
      %v1216 = vpow.pop %v1215
      %v1217 = vmul.f32 %v1094, 1.442695
      %v1218 = vpow.pop %v1217
      %v1219 = vmul.f32 %v1095, 1.442695
      %v1220 = vpow.pop %v1219
      %v1221 = vmul.f32 %v1096, 1.442695
      %v1222 = vpow.pop %v1221
      %v1223 = vmul.f32 %v1097, 1.442695
      %v1224 = vpow.pop %v1223
      %v1225 = vmul.f32 %v1098, 1.442695
      %v1226 = vpow.pop %v1225
      %v1227 = vadd.f32 %v1100, %v1102
      %1228 = vadd.xlane.f32.xlu0 %v1227
      %v1229 = vpop.xlane.xlu0 %1228
      %v1230 = vadd.f32 %v1104, %v1106
      %1231 = vadd.xlane.f32.xlu0 %v1230
      %v1232 = vpop.xlane.xlu0 %1231
      %v1233 = vadd.f32 %v1108, %v1110
      %1234 = vadd.xlane.f32.xlu0 %v1233
      %v1235 = vpop.xlane.xlu0 %1234
      %v1236 = vadd.f32 %v1112, %v1114
      %1237 = vadd.xlane.f32.xlu0 %v1236
      %v1238 = vpop.xlane.xlu0 %1237
      %v1239 = vadd.f32 %v1116, %v1118
      %1240 = vadd.xlane.f32.xlu0 %v1239
      %v1241 = vpop.xlane.xlu0 %1240
      %v1242 = vadd.f32 %v1120, %v1122
      %1243 = vadd.xlane.f32.xlu0 %v1242
      %v1244 = vpop.xlane.xlu0 %1243
      %v1245 = vadd.f32 %v1124, %v1126
      %1246 = vadd.xlane.f32.xlu0 %v1245
      %v1247 = vpop.xlane.xlu0 %1246
      %v1248 = vadd.f32 %v1128, %v1130
      %1249 = vadd.xlane.f32.xlu0 %v1248
      %v1250 = vpop.xlane.xlu0 %1249
      %v1251 = vadd.f32 %v1132, %v1134
      %1252 = vadd.xlane.f32.xlu0 %v1251
      %v1253 = vpop.xlane.xlu0 %1252
      %v1254 = vadd.f32 %v1136, %v1138
      %1255 = vadd.xlane.f32.xlu0 %v1254
      %v1256 = vpop.xlane.xlu0 %1255
      %v1257 = vadd.f32 %v1140, %v1142
      %1258 = vadd.xlane.f32.xlu0 %v1257
      %v1259 = vpop.xlane.xlu0 %1258
      %v1260 = vadd.f32 %v1144, %v1146
      %1261 = vadd.xlane.f32.xlu0 %v1260
      %v1262 = vpop.xlane.xlu0 %1261
      %v1263 = vadd.f32 %v1148, %v1150
      %1264 = vadd.xlane.f32.xlu0 %v1263
      %v1265 = vpop.xlane.xlu0 %1264
      %v1266 = vadd.f32 %v1152, %v1154
      %1267 = vadd.xlane.f32.xlu0 %v1266
      %v1268 = vpop.xlane.xlu0 %1267
      %v1269 = vadd.f32 %v1156, %v1158
      %1270 = vadd.xlane.f32.xlu0 %v1269
      %v1271 = vpop.xlane.xlu0 %1270
      %v1272 = vadd.f32 %v1160, %v1162
      %1273 = vadd.xlane.f32.xlu0 %v1272
      %v1274 = vpop.xlane.xlu0 %1273
      %v1275 = vadd.f32 %v1164, %v1166
      %1276 = vadd.xlane.f32.xlu0 %v1275
      %v1277 = vpop.xlane.xlu0 %1276
      %v1278 = vadd.f32 %v1168, %v1170
      %1279 = vadd.xlane.f32.xlu0 %v1278
      %v1280 = vpop.xlane.xlu0 %1279
      %v1281 = vadd.f32 %v1172, %v1174
      %1282 = vadd.xlane.f32.xlu0 %v1281
      %v1283 = vpop.xlane.xlu0 %1282
      %v1284 = vadd.f32 %v1176, %v1178
      %1285 = vadd.xlane.f32.xlu0 %v1284
      %v1286 = vpop.xlane.xlu0 %1285
      %v1287 = vadd.f32 %v1180, %v1182
      %1288 = vadd.xlane.f32.xlu0 %v1287
      %v1289 = vpop.xlane.xlu0 %1288
      %v1290 = vadd.f32 %v1184, %v1186
      %1291 = vadd.xlane.f32.xlu0 %v1290
      %v1292 = vpop.xlane.xlu0 %1291
      %v1293 = vadd.f32 %v1188, %v1190
      %1294 = vadd.xlane.f32.xlu0 %v1293
      %v1295 = vpop.xlane.xlu0 %1294
      %v1296 = vadd.f32 %v1192, %v1194
      %1297 = vadd.xlane.f32.xlu0 %v1296
      %v1298 = vpop.xlane.xlu0 %1297
      %v1299 = vadd.f32 %v1196, %v1198
      %1300 = vadd.xlane.f32.xlu0 %v1299
      %v1301 = vpop.xlane.xlu0 %1300
      %v1302 = vadd.f32 %v1200, %v1202
      %1303 = vadd.xlane.f32.xlu0 %v1302
      %v1304 = vpop.xlane.xlu0 %1303
      %v1305 = vadd.f32 %v1204, %v1206
      %1306 = vadd.xlane.f32.xlu0 %v1305
      %v1307 = vpop.xlane.xlu0 %1306
      %v1308 = vadd.f32 %v1208, %v1210
      %1309 = vadd.xlane.f32.xlu0 %v1308
      %v1310 = vpop.xlane.xlu0 %1309
      %v1311 = vadd.f32 %v1212, %v1214
      %1312 = vadd.xlane.f32.xlu0 %v1311
      %v1313 = vpop.xlane.xlu0 %1312
      %v1314 = vadd.f32 %v1216, %v1218
      %1315 = vadd.xlane.f32.xlu0 %v1314
      %v1316 = vpop.xlane.xlu0 %1315
      %v1317 = vadd.f32 %v1220, %v1222
      %1318 = vadd.xlane.f32.xlu0 %v1317
      %v1319 = vpop.xlane.xlu0 %1318
      %v1320 = vadd.f32 %v1224, %v1226
      %1321 = vadd.xlane.f32.xlu0 %v1320
      %v1322 = vpop.xlane.xlu0 %1321
      %v1323 = vrcp.pop %v1229
      %v1324 = vrcp.pop %v1232
      %v1325 = vrcp.pop %v1235
      %v1326 = vrcp.pop %v1238
      %v1327 = vrcp.pop %v1241
      %v1328 = vrcp.pop %v1244
      %v1329 = vrcp.pop %v1247
      %v1330 = vrcp.pop %v1250
      %v1331 = vrcp.pop %v1253
      %v1332 = vrcp.pop %v1256
      %v1333 = vrcp.pop %v1259
      %v1334 = vrcp.pop %v1262
      %v1335 = vrcp.pop %v1265
      %v1336 = vrcp.pop %v1268
      %v1337 = vrcp.pop %v1271
      %v1338 = vrcp.pop %v1274
      %v1339 = vrcp.pop %v1277
      %v1340 = vrcp.pop %v1280
      %v1341 = vrcp.pop %v1283
      %v1342 = vrcp.pop %v1286
      %v1343 = vrcp.pop %v1289
      %v1344 = vrcp.pop %v1292
      %v1345 = vrcp.pop %v1295
      %v1346 = vrcp.pop %v1298
      %v1347 = vrcp.pop %v1301
      %v1348 = vrcp.pop %v1304
      %v1349 = vrcp.pop %v1307
      %v1350 = vrcp.pop %v1310
      %v1351 = vrcp.pop %v1313
      %v1352 = vrcp.pop %v1316
      %v1353 = vrcp.pop %v1319
      %v1354 = vrcp.pop %v1322
      %v1355 = vmul.f32 %v1100, %v1323
      %v1356 = vmul.f32 %v1102, %v1323
      %v1357 = vmul.f32 %v1104, %v1324
      %v1358 = vmul.f32 %v1106, %v1324
      %v1359 = vmul.f32 %v1108, %v1325
      %v1360 = vmul.f32 %v1110, %v1325
      %v1361 = vmul.f32 %v1112, %v1326
      %v1362 = vmul.f32 %v1114, %v1326
      %v1363 = vmul.f32 %v1116, %v1327
      %v1364 = vmul.f32 %v1118, %v1327
      %v1365 = vmul.f32 %v1120, %v1328
      %v1366 = vmul.f32 %v1122, %v1328
      %v1367 = vmul.f32 %v1124, %v1329
      %v1368 = vmul.f32 %v1126, %v1329
      %v1369 = vmul.f32 %v1128, %v1330
      %v1370 = vmul.f32 %v1130, %v1330
      %v1371 = vmul.f32 %v1132, %v1331
      %v1372 = vmul.f32 %v1134, %v1331
      %v1373 = vmul.f32 %v1136, %v1332
      %v1374 = vmul.f32 %v1138, %v1332
      %v1375 = vmul.f32 %v1140, %v1333
      %v1376 = vmul.f32 %v1142, %v1333
      %v1377 = vmul.f32 %v1144, %v1334
      %v1378 = vmul.f32 %v1146, %v1334
      %v1379 = vmul.f32 %v1148, %v1335
      %v1380 = vmul.f32 %v1150, %v1335
      %v1381 = vmul.f32 %v1152, %v1336
      %v1382 = vmul.f32 %v1154, %v1336
      %v1383 = vmul.f32 %v1156, %v1337
      %v1384 = vmul.f32 %v1158, %v1337
      %v1385 = vmul.f32 %v1160, %v1338
      %v1386 = vmul.f32 %v1162, %v1338
      %v1387 = vmul.f32 %v1164, %v1339
      %v1388 = vmul.f32 %v1166, %v1339
      %v1389 = vmul.f32 %v1168, %v1340
      %v1390 = vmul.f32 %v1170, %v1340
      %v1391 = vmul.f32 %v1172, %v1341
      %v1392 = vmul.f32 %v1174, %v1341
      %v1393 = vmul.f32 %v1176, %v1342
      %v1394 = vmul.f32 %v1178, %v1342
      %v1395 = vmul.f32 %v1180, %v1343
      %v1396 = vmul.f32 %v1182, %v1343
      %v1397 = vmul.f32 %v1184, %v1344
      %v1398 = vmul.f32 %v1186, %v1344
      %v1399 = vmul.f32 %v1188, %v1345
      %v1400 = vmul.f32 %v1190, %v1345
      %v1401 = vmul.f32 %v1192, %v1346
      %v1402 = vmul.f32 %v1194, %v1346
      %v1403 = vmul.f32 %v1196, %v1347
      %v1404 = vmul.f32 %v1198, %v1347
      %v1405 = vmul.f32 %v1200, %v1348
      %v1406 = vmul.f32 %v1202, %v1348
      %v1407 = vmul.f32 %v1204, %v1349
      %v1408 = vmul.f32 %v1206, %v1349
      %v1409 = vmul.f32 %v1208, %v1350
      %v1410 = vmul.f32 %v1210, %v1350
      %v1411 = vmul.f32 %v1212, %v1351
      %v1412 = vmul.f32 %v1214, %v1351
      %v1413 = vmul.f32 %v1216, %v1352
      %v1414 = vmul.f32 %v1218, %v1352
      %v1415 = vmul.f32 %v1220, %v1353
      %v1416 = vmul.f32 %v1222, %v1353
      %v1417 = vmul.f32 %v1224, %v1354
      %v1418 = vmul.f32 %v1226, %v1354
      %v1419 = vpack.c.bf16 %v1357, %v1355
      %v1420 = vpack.c.bf16 %v1358, %v1356
      %v1421 = vpack.c.bf16 %v1361, %v1359
      %v1422 = vpack.c.bf16 %v1362, %v1360
      %v1423 = vpack.c.bf16 %v1365, %v1363
      %v1424 = vpack.c.bf16 %v1366, %v1364
      %v1425 = vpack.c.bf16 %v1369, %v1367
      %v1426 = vpack.c.bf16 %v1370, %v1368
      %v1427 = vpack.c.bf16 %v1373, %v1371
      %v1428 = vpack.c.bf16 %v1374, %v1372
      %v1429 = vpack.c.bf16 %v1377, %v1375
      %v1430 = vpack.c.bf16 %v1378, %v1376
      %v1431 = vpack.c.bf16 %v1381, %v1379
      %v1432 = vpack.c.bf16 %v1382, %v1380
      %v1433 = vpack.c.bf16 %v1385, %v1383
      %v1434 = vpack.c.bf16 %v1386, %v1384
      %v1435 = vpack.c.bf16 %v1389, %v1387
      %v1436 = vpack.c.bf16 %v1390, %v1388
      %v1437 = vpack.c.bf16 %v1393, %v1391
      %v1438 = vpack.c.bf16 %v1394, %v1392
      %v1439 = vpack.c.bf16 %v1397, %v1395
      %v1440 = vpack.c.bf16 %v1398, %v1396
      %v1441 = vpack.c.bf16 %v1401, %v1399
      %v1442 = vpack.c.bf16 %v1402, %v1400
      %v1443 = vpack.c.bf16 %v1405, %v1403
      %v1444 = vpack.c.bf16 %v1406, %v1404
      %v1445 = vpack.c.bf16 %v1409, %v1407
      %v1446 = vpack.c.bf16 %v1410, %v1408
      %v1447 = vpack.c.bf16 %v1413, %v1411
      %v1448 = vpack.c.bf16 %v1414, %v1412
      %v1449 = vpack.c.bf16 %v1417, %v1415
      %v1450 = vpack.c.bf16 %v1418, %v1416
      %v1451 = vpack.c.bf16 %v377, %v377
      %v1452 = vpack.c.bf16 %v406, %v406
      %1453 = vmatpush.bf16.msra.mxu0 %v1433
      %1454 = vmatpush.bf16.msra.mxu0 %v1431
      %1455 = vmatpush.bf16.msra.mxu0 %v1429
      %1456 = vmatpush.bf16.msra.mxu0 %v1427
      %1457 = vmatpush.bf16.msra.mxu0 %v1425
      %1458 = vmatpush.bf16.msra.mxu0 %v1423
      %1459 = vmatpush.bf16.msra.mxu0 %v1421
      %1460 = vmatpush.bf16.msra.mxu0 %v1419
      %1461 = vmatmul.bf16.gmra.mxu0 %v1451
      %v1462 = vpop.f32.mrf.mxu0
      %v1463 = vadd.f32 %v656, %v1462
      %v1464 = vpop.f32.mrf.mxu0
      %1465 = vdwg.mxu0
      %1466 = vmatpush.bf16.msra.mxu0 %v1449
      %1467 = vmatpush.bf16.msra.mxu0 %v1447
      %1468 = vmatpush.bf16.msra.mxu0 %v1445
      %1469 = vmatpush.bf16.msra.mxu0 %v1443
      %1470 = vmatpush.bf16.msra.mxu0 %v1441
      %1471 = vmatpush.bf16.msra.mxu0 %v1439
      %1472 = vmatpush.bf16.msra.mxu0 %v1437
      %1473 = vmatpush.bf16.msra.mxu0 %v1435
      %1474 = vmatmul.bf16.gmra.mxu0 %v1452
      %v1475 = vpop.f32.mrf.mxu0
      %v1476 = vadd.f32 %v1463, %v1475
      %v1477 = vpop.f32.mrf.mxu0
      %1478 = vdwg.mxu0
      %1479 = vmatpush.bf16.msra.mxu0 %v1434
      %1480 = vmatpush.bf16.msra.mxu0 %v1432
      %1481 = vmatpush.bf16.msra.mxu0 %v1430
      %1482 = vmatpush.bf16.msra.mxu0 %v1428
      %1483 = vmatpush.bf16.msra.mxu0 %v1426
      %1484 = vmatpush.bf16.msra.mxu0 %v1424
      %1485 = vmatpush.bf16.msra.mxu0 %v1422
      %1486 = vmatpush.bf16.msra.mxu0 %v1420
      %1487 = vmatmul.bf16.gmra.mxu0 %v1451
      %v1488 = vpop.f32.mrf.mxu0
      %v1489 = vadd.f32 %v676, %v1488
      %v1490 = vpop.f32.mrf.mxu0
      %1491 = vdwg.mxu0
      %1492 = vmatpush.bf16.msra.mxu0 %v1450
      %1493 = vmatpush.bf16.msra.mxu0 %v1448
      %1494 = vmatpush.bf16.msra.mxu0 %v1446
      %1495 = vmatpush.bf16.msra.mxu0 %v1444
      %1496 = vmatpush.bf16.msra.mxu0 %v1442
      %1497 = vmatpush.bf16.msra.mxu0 %v1440
      %1498 = vmatpush.bf16.msra.mxu0 %v1438
      %1499 = vmatpush.bf16.msra.mxu0 %v1436
      %1500 = vmatmul.bf16.gmra.mxu0 %v1452
      %v1501 = vpop.f32.mrf.mxu0
      %v1502 = vadd.f32 %v1489, %v1501
      %v1503 = vpop.f32.mrf.mxu0
      %1504 = vdwg.mxu0
      %v1505 = vsel %vm348, %v1476, 0.0
      %v1506 = vsel %vm348, %v1502, 0.0
      %v1507 = vadd.f32 %v1505, %v1506
      %1508 = vadd.xlane.f32.xlu0 %v1507
      %v1509 = vpop.xlane.xlu0 %1508
      %v1510 = vrcp.pop 256.0
      %v1511 = vmul.f32 256.0, %v1510
      %v1512 = vsub.f32 1.0, %v1511
      %v1513 = vmul.f32 %v1510, %v1512
      %v1514 = vadd.f32 %v1510, %v1513
      %vm1515 = vweird.f32 %v1510
      %v1516 = vsel %vm1515, %v1510, %v1514
      %v1517 = vmul.f32 %v1509, %v1516
      %s1518 = scalar_lea.vmem %s3, 8
      %v1519 = vld [vmem:[%s1518] sm:$0xf]
      %s1520 = scalar_lea.vmem %s4, 8
      %v1521 = vld [vmem:[%s1520] sm:$0xf]
      %v1523 = vsel %vm335, %v1519, 0
      %v1526 = vsel %vm348, %v1517, 0
      %1528 = vmatpush.msra.mxu0 0.0
      %1529 = vmatpush.msra.mxu0 0.0
      %1530 = vmatpush.msra.mxu0 0.0
      %1531 = vmatpush.msra.mxu0 0.0
      %1532 = vmatpush.msra.mxu0 0.0
      %1533 = vmatpush.msra.mxu0 0.0
      %1534 = vmatpush.msra.mxu0 0.0
      %1535 = vmatpush.msra.mxu0 0.0
      %1536 = vmatpush.msra.mxu0 0.0
      %1537 = vmatpush.msra.mxu0 0.0
      %1538 = vmatpush.msra.mxu0 0.0
      %1539 = vmatpush.msra.mxu0 0.0
      %1540 = vmatpush.msra.mxu0 0.0
      %1541 = vmatpush.msra.mxu0 0.0
      %1542 = vmatpush.msra.mxu0 0.0
      %1543 = vmatpush.msra.mxu0 %v1526
      %1544 = vmatmul.f32.gmra.mxu0 %v1523
      %v1545 = vpop.f32.mrf.mxu0
      %v1546 = vadd.f32 %v1521, %v1545
      %1547 = vdwg.mxu0
      %v1548 = vmul.f32 %v1546, %v1546
      %vm1549 = vcmask 3072
      %v1550 = vsel %vm1549, %v1548, 0.0
      %1551 = vadd.xlane.f32.xlu0 %v1550
      %v1552 = vpop.xlane.xlu0 %1551
      %v1553 = vrot.slane %v1552, 4
      %v1554 = vadd.f32 %v1552, %v1553
      %v1555 = vrot.slane %v1554, 2
      %v1556 = vadd.f32 %v1554, %v1555
      %v1557 = vrot.slane %v1556, 1
      %v1558 = vadd.f32 %v1556, %v1557
      %s1559 = vtos %v1558
      %v1560 = vstv %s1559
      %v1561 = vrsqrt.pop %v1560
      %v1562 = vmul.f32 %v1561, %v1560
      %v1563 = vmul.f32 %v1562, %v1561
      %v1564 = vmul.f32 0.5, %v1563
      %v1565 = vsub.f32 1.5, %v1564
      %v1566 = vmul.f32 %v1561, %v1565
      %v1567 = vmul.f32 %v1560, %v1566
      %vm1568 = vcmp.eq.f32.partialorder %v1560, inf
      %v1569 = vsel %vm1568, %v1560, %v1567
      %vm1570 = vcmp.eq.f32.partialorder %v1560, 0.0
      %v1571 = vand.u32 %v1560, 2147483648
      %v1572 = vsel %vm1570, %v1571, %v1569
      %s1573 = vtos %v1572
      %s1574 = smax.f32 %s1573, 1e-12
      %v1575 = vstv %s1574
      %v1576 = vrcp.pop %v1575
      %v1577 = vmul.f32 %v1575, %v1576
      %v1578 = vsub.f32 1.0, %v1577
      %v1579 = vmul.f32 %v1576, %v1578
      %v1580 = vadd.f32 %v1576, %v1579
      %vm1581 = vweird.f32 %v1575
      %vm1582 = vweird.f32 %v1576
      %vm1583 = vmor %vm1581, %vm1582
      %v1584 = vsel %vm1583, %v1576, %v1580
      %v1585 = vand.u32 2147483647, %v1575
      %vm1586 = vcmp.eq.f32.partialorder %v1585, 8.507059e+37
      %v1587 = vand.u32 %v1575, 2147483648
      %v1588 = vor.u32 1.1754944e-38, %v1587
      %v1589 = vsel %vm1586, %v1588, %v1584
      %v1590 = vmul.f32 %v1546, %v1589
      %s1591 = scalar_lea.vmem %s3, 12
      %v1592 = vld [vmem:[%s1591] sm:$0xf]
      %s1593 = scalar_lea.vmem %s4, 12
      %v1594 = vld [vmem:[%s1593] sm:$0xf]
      %v1596 = vsel %vm335, %v1592, 0
      %v1599 = vsel %vm348, %v1590, 0
      %1601 = vmatpush.msra.mxu0 0.0
      %1602 = vmatpush.msra.mxu0 0.0
      %1603 = vmatpush.msra.mxu0 0.0
      %1604 = vmatpush.msra.mxu0 0.0
      %1605 = vmatpush.msra.mxu0 0.0
      %1606 = vmatpush.msra.mxu0 0.0
      %1607 = vmatpush.msra.mxu0 0.0
      %1608 = vmatpush.msra.mxu0 0.0
      %1609 = vmatpush.msra.mxu0 0.0
      %1610 = vmatpush.msra.mxu0 0.0
      %1611 = vmatpush.msra.mxu0 0.0
      %1612 = vmatpush.msra.mxu0 0.0
      %1613 = vmatpush.msra.mxu0 0.0
      %1614 = vmatpush.msra.mxu0 0.0
      %1615 = vmatpush.msra.mxu0 0.0
      %1616 = vmatpush.msra.mxu0 %v1599
      %1617 = vmatmul.f32.gmra.mxu0 %v1596
      %v1618 = vpop.f32.mrf.mxu0
      %v1619 = vadd.f32 %v1594, %v1618
      %1620 = vdwg.mxu0
      %1621 = vst.msk [vmem:[%s276] sm:$0xf] %vm1549, %v1619
      %p1622 = scmp.lt.s32.totalorder %s18, 1
      %s1623 = scalar_select %p1622, %s18, 1
      %s1624 = smul.addr %s1623, 4
      %s1625 = scalar_lea.vmem %s7, %s1624
      // Predicated region
      $region49: #{tpu_custom_call.1} parent=47 // pred_check
        %p1626 = pneg %p188
      $region50: #{tpu_custom_call.1} parent=47 // pred_check_branch
        %1628 = sbr.rel (%p1626) target = $region52
      $region51: #{tpu_custom_call.1} parent=47 // pred_region
        _
      $region52: #{tpu_custom_call.1} parent=47 // pred_fallthru
        _
    $region48: #{tpu_custom_call.1} parent=5 // pred_fallthru
      _
    %p1629 = scmp.le.s32.totalorder 2, %s13
    // Predicated region
    $region53: #{tpu_custom_call.1} parent=5 // pred_check
      %p1630 = pneg %p1629
    $region54: #{tpu_custom_call.1} parent=5 // pred_check_branch
      %1632 = sbr.rel (%p1630) target = $region56
    $region55: #{tpu_custom_call.1} parent=5 // pred_region
      %s1633 = ssub.s32 %s13, 2
      // Predicated region
      $region57: #{tpu_custom_call.1} parent=55 // pred_check
        %p1634 = pneg %p194
      $region58: #{tpu_custom_call.1} parent=55 // pred_check_branch
        %1636 = sbr.rel (%p1634) target = $region60
      $region59: #{tpu_custom_call.1} parent=55 // pred_region
        %p1637 = scmp.lt.s32.totalorder %s19, 1
        %s1638 = scalar_select %p1637, %s19, 1
        %s1639 = smul.addr %s1638, 4
        %s1640 = scalar_lea.vmem %s7, %s1639
      $region60: #{tpu_custom_call.1} parent=55 // pred_fallthru
        _
    $region56: #{tpu_custom_call.1} parent=5 // pred_fallthru
      _
  $region6: #{tpu_custom_call.1} parent=0 // loop_footer
    %s17 = sadd.s32 1, %s13
  $region7: #{tpu_custom_call.1} parent=0 // loop_footer_branch
    %12 = sbr.rel target = $region3
  $region8: #{tpu_custom_call.1} parent=0 // loop_exit
    _

</llo_original>
